<compile_context>
chip_gen: v5e
topology: v5e:2x2
jax: 0.10.0
libtpu: 0.0.40
codegen_flags: <defaults>
</compile_context>

<pallas_src>
import functools

import jax
import jax.numpy as jnp
import numpy as np
from jax.experimental import pallas as pl
from jax.experimental.pallas import tpu as pltpu


def _sentiment_attention_kernel(x_ref, w_ref, b_ref, attended_ref, attn_ref):
    tb, T, H = x_ref.shape

    x = x_ref[...]                                                 # [tb, T, H] f32
    # Linear(H, 1) weight row, broadcast to a length-1 "query" per batch element
    # (hoisted once per tile).
    w = jnp.broadcast_to(w_ref[...].reshape(1, 1, H), (tb, 1, H))  # [tb, 1, H]

    # scores = x @ W^T + b   -> [tb, 1, T]   (MXU, batched; T is lane-dense)
    scores = jnp.einsum("bqh,bth->bqt", w, x,
                        preferred_element_type=jnp.float32) + b_ref[0, 0]

    # Numerically-stable softmax over the sequence axis (last axis == lanes).
    m = jnp.max(scores, axis=-1, keepdims=True)
    e = jnp.exp(scores - m)
    weights = e / jnp.sum(e, axis=-1, keepdims=True)               # [tb, 1, T]

    # attended = weights @ x  -> [tb, 1, H]  (MXU, batched [1,T] @ [T,H])
    attended = jnp.einsum("bqt,bth->bqh", weights, x,
                          preferred_element_type=jnp.float32)

    # Lane-dense stores, no transpose inside the kernel.
    attended_ref[...] = attended.reshape(tb, H).astype(attended_ref.dtype)
    attn_ref[...] = weights.reshape(tb, T).astype(attn_ref.dtype)


@functools.partial(jax.jit, static_argnames=("batch_tile",))
def sentiment_attention_forward(x, att_w, att_b, *, batch_tile=8):
    """x: [B, T, H]; att_w: [1, H] (nn.Linear(H,1).weight); att_b: [1] (bias).

    Returns (attended [B, H], attention_weights [B, T])."""
    assert batch_tile % 8 == 0, "batch tile must be a multiple of 8 (sublanes)"
    x = x.astype(jnp.float32)
    B, T, H = x.shape
    tb = int(batch_tile)

    # Pad the batch so it tiles evenly (padded rows produce finite garbage that
    # is sliced off; zeros give uniform softmax weights, never NaN).
    b_pad = pl.cdiv(B, tb) * tb
    if b_pad != B:
        x = jnp.pad(x, ((0, b_pad - B), (0, 0), (0, 0)))

    att_w = att_w.reshape(1, H).astype(jnp.float32)
    att_b = att_b.reshape(1, 1).astype(jnp.float32)

    attended, attn = pl.pallas_call(
        _sentiment_attention_kernel,
        out_shape=(jax.ShapeDtypeStruct((b_pad, H), jnp.float32),
                   jax.ShapeDtypeStruct((b_pad, T), jnp.float32)),
        grid=(b_pad // tb,),
        in_specs=[
            pl.BlockSpec((tb, T, H), lambda i: (i, 0, 0)),  # x batch tile
            pl.BlockSpec((1, H), lambda i: (0, 0)),         # attention weight
            pl.BlockSpec((1, 1), lambda i: (0, 0)),         # attention bias
        ],
        out_specs=(
            pl.BlockSpec((tb, H), lambda i: (i, 0)),        # attended
            pl.BlockSpec((tb, T), lambda i: (i, 0)),        # attention weights
        ),
        compiler_params=pltpu.CompilerParams(
            dimension_semantics=("parallel",),              # v7x: split tiles over 2 TCs
            vmem_limit_bytes=32 * 1024 * 1024,
        ),
    )(x, att_w, att_b)

    return attended[:B], attn[:B]


def _reference(x, att_w, att_b):
    """Pure numpy reproduction of the PyTorch forward (for a sanity check)."""
    x = np.asarray(x, np.float32)
    w = np.asarray(att_w, np.float32).reshape(-1)       # [H]
    b = float(np.asarray(att_b).reshape(()))
    scores = x @ w + b                                   # [B, T]
    scores = scores - scores.max(axis=1, keepdims=True)
    e = np.exp(scores)
    weights = e / e.sum(axis=1, keepdims=True)           # [B, T]
    attended = np.einsum("bt,bth->bh", weights, x)       # [B, H]
    return attended, weights


if __name__ == "__main__":
    # Small but TPU-friendly shapes: batch=16, seq=128, hidden=256
    # (lane-dense outputs; two batch tiles so the grid is exercised).
    B, T, H = 16, 128, 256

    key = jax.random.PRNGKey(0)
    kx, kw, kb = jax.random.split(key, 3)
    x = jax.random.normal(kx, (B, T, H), jnp.float32)
    att_w = 0.1 * jax.random.normal(kw, (1, H), jnp.float32)   # nn.Linear(H, 1).weight
    att_b = 0.1 * jax.random.normal(kb, (1,), jnp.float32)     # nn.Linear(H, 1).bias

    attended, attn_weights = sentiment_attention_forward(x, att_w, att_b, batch_tile=8)
    jax.block_until_ready((attended, attn_weights))

    assert attended.shape == (B, H)
    assert attn_weights.shape == (B, T)

    ref_attended, ref_weights = _reference(x, att_w, att_b)
    np.testing.assert_allclose(np.asarray(attn_weights), ref_weights, atol=2e-2, rtol=2e-2)
    np.testing.assert_allclose(np.asarray(attended), ref_attended, atol=2e-2, rtol=2e-2)

    print("KERNEL_OK")
</pallas_src>

<mosaic_0001>
module attributes {stable_mosaic.version = 11 : i64} {
  func.func @_sentiment_attention_kernel(%arg0: i32, %arg1: memref<8x128x256xf32, #tpu.memory_space<vmem>>, %arg2: memref<1x256xf32, #tpu.memory_space<vmem>>, %arg3: memref<1x1xf32, #tpu.memory_space<vmem>>, %arg4: memref<8x256xf32, #tpu.memory_space<vmem>>, %arg5: memref<8x128xf32, #tpu.memory_space<vmem>>) attributes {dimension_semantics = [#tpu.dimension_semantics<parallel>], iteration_bounds = array<i64: 2>, scalar_prefetch = 0 : i64, scratch_operands = 0 : i64, tpu.core_type = #tpu.core_type<tc>, window_params = [{transform_indices = @transform_0, window_bounds = array<i64: 8, 128, 256>}, {pipeline_mode = #tpu.pipeline_mode<synchronous>, transform_indices = @transform_1, window_bounds = array<i64: 1, 256>}, {pipeline_mode = #tpu.pipeline_mode<synchronous>, transform_indices = @transform_2, window_bounds = array<i64: 1, 1>}, {transform_indices = @transform_3, window_bounds = array<i64: 8, 256>}, {transform_indices = @transform_4, window_bounds = array<i64: 8, 128>}]} {
    %c0 = arith.constant 0 : index
    %c0_0 = arith.constant 0 : index
    %c0_1 = arith.constant 0 : index
    %0 = vector.load %arg1[%c0, %c0_0, %c0_1] : memref<8x128x256xf32, #tpu.memory_space<vmem>>, vector<8x128x256xf32>
    %c0_2 = arith.constant 0 : index
    %c0_3 = arith.constant 0 : index
    %1 = vector.load %arg2[%c0_2, %c0_3] : memref<1x256xf32, #tpu.memory_space<vmem>>, vector<1x256xf32>
    %2 = vector.shape_cast %1 : vector<1x256xf32> to vector<1x1x256xf32>
    %3 = vector.shape_cast %2 : vector<1x1x256xf32> to vector<1x1x256xf32>
    %4 = vector.broadcast %3 : vector<1x1x256xf32> to vector<8x1x256xf32>
    "tpu.trace_start"() <{level = 10 : i32, message = "bqh,bth->bqt"}> : () -> ()
    %cst = arith.constant dense<0.000000e+00> : vector<8x1x128xf32>
    %5 = tpu.matmul %4, %0, %cst {dimension_numbers = #tpu.dot_dimension_numbers<[2], [2], [1], [1], [0, 0, 0, 1, 1, 1], [0], [0]>} : vector<8x1x256xf32>, vector<8x128x256xf32>, vector<8x1x128xf32> -> vector<8x1x128xf32>
    "tpu.trace_stop"() : () -> ()
    %c0_4 = arith.constant 0 : index
    %c0_5 = arith.constant 0 : index
    %6 = vector.load %arg3[%c0_4, %c0_5] : memref<1x1xf32, #tpu.memory_space<vmem>>, vector<1x1xf32>
    %7 = vector.extract %6[0, 0] : f32 from vector<1x1xf32>
    %8 = vector.broadcast %7 : f32 to vector<8x1x128xf32>
    %9 = arith.addf %5, %8 : vector<8x1x128xf32>
    %cst_6 = arith.constant dense<0xFF800000> : vector<8x1xf32>
    %10 = vector.multi_reduction <maximumf>, %9, %cst_6 [2] : vector<8x1x128xf32> to vector<8x1xf32>
    %11 = vector.shape_cast %10 : vector<8x1xf32> to vector<8x1x1xf32>
    %12 = vector.broadcast %11 : vector<8x1x1xf32> to vector<8x1x128xf32>
    %13 = arith.subf %9, %12 : vector<8x1x128xf32>
    %14 = math.exp %13 : vector<8x1x128xf32>
    %cst_7 = arith.constant dense<0.000000e+00> : vector<8x1xf32>
    %15 = vector.multi_reduction <add>, %14, %cst_7 [2] : vector<8x1x128xf32> to vector<8x1xf32>
    %16 = vector.shape_cast %15 : vector<8x1xf32> to vector<8x1x1xf32>
    %17 = vector.broadcast %16 : vector<8x1x1xf32> to vector<8x1x128xf32>
    %18 = arith.divf %14, %17 : vector<8x1x128xf32>
    "tpu.trace_start"() <{level = 10 : i32, message = "bqt,bth->bqh"}> : () -> ()
    %cst_8 = arith.constant dense<0.000000e+00> : vector<8x1x256xf32>
    %19 = tpu.matmul %18, %0, %cst_8 {dimension_numbers = #tpu.dot_dimension_numbers<[2], [1], [1], [2], [0, 0, 0, 1, 1, 2], [0], [0]>} : vector<8x1x128xf32>, vector<8x128x256xf32>, vector<8x1x256xf32> -> vector<8x1x256xf32>
    "tpu.trace_stop"() : () -> ()
    %20 = vector.shape_cast %19 : vector<8x1x256xf32> to vector<8x256xf32>
    %c0_9 = arith.constant 0 : index
    %c0_10 = arith.constant 0 : index
    %21 = vector.load %arg4[%c0_9, %c0_10] : memref<8x256xf32, #tpu.memory_space<vmem>>, vector<8x256xf32>
    tpu.vector_store %arg4[%c0_9, %c0_10], %20 {strides = array<i32>} : memref<8x256xf32, #tpu.memory_space<vmem>>, vector<8x256xf32>,
    %22 = vector.shape_cast %18 : vector<8x1x128xf32> to vector<8x128xf32>
    %c0_11 = arith.constant 0 : index
    %c0_12 = arith.constant 0 : index
    %23 = vector.load %arg5[%c0_11, %c0_12] : memref<8x128xf32, #tpu.memory_space<vmem>>, vector<8x128xf32>
    tpu.vector_store %arg5[%c0_11, %c0_12], %22 {strides = array<i32>} : memref<8x128xf32, #tpu.memory_space<vmem>>, vector<8x128xf32>,
    return
  }
  func.func @transform_0(%arg0: i32) -> (i32, i32, i32) {
    %c0_i32 = arith.constant 0 : i32
    %c0_i32_0 = arith.constant 0 : i32
    %c0_i32_1 = arith.constant 0 : i32
    return %arg0, %c0_i32, %c0_i32_0 : i32, i32, i32
  }
  func.func @transform_1(%arg0: i32) -> (i32, i32) {
    %c0_i32 = arith.constant 0 : i32
    %c0_i32_0 = arith.constant 0 : i32
    %c0_i32_1 = arith.constant 0 : i32
    return %c0_i32, %c0_i32_0 : i32, i32
  }
  func.func @transform_2(%arg0: i32) -> (i32, i32) {
    %c0_i32 = arith.constant 0 : i32
    %c0_i32_0 = arith.constant 0 : i32
    %c0_i32_1 = arith.constant 0 : i32
    return %c0_i32, %c0_i32_0 : i32, i32
  }
  func.func @transform_3(%arg0: i32) -> (i32, i32) {
    %c0_i32 = arith.constant 0 : i32
    %c0_i32_0 = arith.constant 0 : i32
    return %arg0, %c0_i32 : i32, i32
  }
  func.func @transform_4(%arg0: i32) -> (i32, i32) {
    %c0_i32 = arith.constant 0 : i32
    %c0_i32_0 = arith.constant 0 : i32
    return %arg0, %c0_i32 : i32, i32
  }
}

</mosaic_0001>

<llo_original>
// kernel: sentiment_attention_forward.1
$region0: #{sentiment_attention_forward.1}
  #allocation0 [shape = 'u32[]', space=smem, size = 0x4, offset = 0x4, fixed_abs, tag = 'smem constant byte address 0x4 - core index']
  #allocation1 [shape = 'u32[72,128]{1,0:T(1,128)}', space=vmem, size = 0x9000, scoped, tag = 'internal scratch']
  #allocation2 [shape = 'f32[1,1]{1,0:T(1,128)S(1)}', space=vmem, size = 0x200, scoped, tag = 'scoped memory for sentiment_attention_forward.1']
  %s0 = inlined_call_operand.hbm [shape: f32[16,128,256], index: 0, kind: input, shape index: {}]
  %s1 = inlined_call_operand.hbm [shape: f32[1,256], index: 1, kind: input, shape index: {}]
  %s2 = inlined_call_operand.<no memory space> [shape: f32[1,1], index: 2, kind: input, shape index: {}]
  %s3 = inlined_call_operand.hbm [shape: f32[16,256], index: 3, kind: output, shape index: {0}]
  %s4 = inlined_call_operand.hbm [shape: f32[16,128], index: 4, kind: output, shape index: {1}]
  %5 = xla_tuple %s3, %s4
  %s6 = sld [smem:[#allocation0]]
  $region61: #{sentiment_attention_forward.1} parent=0
    _
  %s8 = ssub.s32 1, %s6
  %s9 = scalar_select 0, %s8, %s6
  %v10 = vstv %s2
  %11 = vst [vmem:[#allocation2] sm:$0x1] %v10
  $region1: #{sentiment_attention_forward.1} parent=0
    #allocation3 [shape = 'u8[2097152]{0}', space=vmem, size = 0x200000, scoped, tag = 'input window, operand 0']
    #allocation4 [shape = 's32[2]{0}', space=sflag, size = 0x8, scoped, tag = 'scoped memory for sentiment_attention_forward.1']
    #allocation5 [shape = 's32[2]{0}', space=sflag, size = 0x8, scoped, tag = 'scoped memory for sentiment_attention_forward.1']
    #allocation6 [shape = 'u8[1024]{0}', space=vmem, size = 0x400, scoped, tag = 'input window, operand 1, single buffered']
    #allocation7 [shape = 's32[1]{0}', space=sflag, size = 0x4, scoped, tag = 'scoped memory for sentiment_attention_forward.1']
    #allocation8 [shape = 'u8[16384]{0}', space=vmem, size = 0x4000, scoped, tag = 'output window, operand 0']
    #allocation9 [shape = 'u8[8192]{0}', space=vmem, size = 0x2000, scoped, tag = 'output window, operand 1']
    #allocation10 [shape = 's32[2]{0}', space=sflag, size = 0x8, scoped, tag = 'scoped memory for sentiment_attention_forward.1']
    %12 = vsyncpa [#allocation4], 0
    %s13 = scalar_lea.sflag [#allocation4], 1
    %14 = vsyncpa %s13, 0
    %15 = vsyncpa [#allocation7], 0
    %16 = vsyncpa [#allocation5], 0
    %s17 = scalar_lea.sflag [#allocation5], 1
    %18 = vsyncpa %s17, 0
    %19 = vsyncpa [#allocation10], 0
    %s20 = scalar_lea.sflag [#allocation10], 1
    %21 = vsyncpa %s20, 0
    loop: start=0, step=1, limit=4
    $region2: #{sentiment_attention_forward.1} parent=1 // loop_pre_header
      _
    $region3: #{sentiment_attention_forward.1} parent=1 // loop_header
      %s23 = sphi 0, %s27
      %p24 = scmp.ge.s32.totalorder %s23, 4
      %s33 = sphi 0, %s35
      %s36 = sphi 0, %s33
      %s37 = sphi 0, %s36
      %s53 = sphi 0, %s37
      %s57 = sphi 0, %s57
      %s59 = sphi 0, %s57
      %s60 = sphi 0, %s59
      %s74 = sphi 0, %s60
      %s78 = sphi 0, %s78
      %s80 = sphi 0, %s78
      %s81 = sphi 0, %s80
      %s95 = sphi 0, %s81
      %s101 = sphi 0, %s103
      %s104 = sphi 0, %s101
      %s105 = sphi 0, %s104
      %s121 = sphi 0, %s105
      %s127 = sphi 0, %s129
      %s130 = sphi 0, %s127
      %s131 = sphi 0, %s130
      %s147 = sphi 0, %s131
    $region4: #{sentiment_attention_forward.1} parent=1 // loop_header_branch
      %26 = sbr.rel (%p24) target = $region8
    $region5: #{sentiment_attention_forward.1} parent=1 // loop_body
      %s28 = ssub.s32 %s23, 1
      %s29 = ssub.s32 %s23, 2
      %s30 = sadd.s32 %s23, 1
      %s31 = ssub.s32 %s23, %s30
      %p32 = scmp.eq.s32.totalorder %s31, 0
      %s34 = sadd.s32 %s33, 1
      %s35 = scalar_select %p32, %s33, %s34
      %p38 = pneg %p32
      %p39 = scmp.eq.s32.totalorder %s23, 1
      %p40 = por %p38, %p39
      %p41 = scmp.ne.s32.totalorder %s33, %s36
      %p42 = scmp.eq.s32.totalorder %s23, 0
      %p43 = por %p41, %p42
      %p44 = scmp.ne.s32.totalorder %s33, %s36
      %p45 = scmp.eq.s32.totalorder %s28, 1
      %p46 = por %p44, %p45
      %p47 = scmp.ne.s32.totalorder %s36, %s37
      %p48 = scmp.eq.s32.totalorder %s28, 0
      %p49 = por %p47, %p48
      %p50 = scmp.ne.s32.totalorder %s36, %s37
      %p51 = scmp.eq.s32.totalorder %s29, 1
      %p52 = por %p50, %p51
      %p54 = scmp.ne.s32.totalorder %s37, %s53
      %p55 = scmp.eq.s32.totalorder %s29, 0
      %p56 = por %p54, %p55
      %s58 = sadd.s32 %s57, 1
      %p61 = scmp.eq.s32.totalorder %s23, 1
      %p62 = scmp.ne.s32.totalorder %s57, %s59
      %p63 = scmp.eq.s32.totalorder %s23, 0
      %p64 = por %p62, %p63
      %p65 = scmp.ne.s32.totalorder %s57, %s59
      %p66 = scmp.eq.s32.totalorder %s28, 1
      %p67 = por %p65, %p66
      %p68 = scmp.ne.s32.totalorder %s59, %s60
      %p69 = scmp.eq.s32.totalorder %s28, 0
      %p70 = por %p68, %p69
      %p71 = scmp.ne.s32.totalorder %s59, %s60
      %p72 = scmp.eq.s32.totalorder %s29, 1
      %p73 = por %p71, %p72
      %p75 = scmp.ne.s32.totalorder %s60, %s74
      %p76 = scmp.eq.s32.totalorder %s29, 0
      %p77 = por %p75, %p76
      %s79 = sadd.s32 %s78, 1
      %p82 = scmp.eq.s32.totalorder %s23, 1
      %p83 = scmp.ne.s32.totalorder %s78, %s80
      %p84 = scmp.eq.s32.totalorder %s23, 0
      %p85 = por %p83, %p84
      %p86 = scmp.ne.s32.totalorder %s78, %s80
      %p87 = scmp.eq.s32.totalorder %s28, 1
      %p88 = por %p86, %p87
      %p89 = scmp.ne.s32.totalorder %s80, %s81
      %p90 = scmp.eq.s32.totalorder %s28, 0
      %p91 = por %p89, %p90
      %p92 = scmp.ne.s32.totalorder %s80, %s81
      %p93 = scmp.eq.s32.totalorder %s29, 1
      %p94 = por %p92, %p93
      %p96 = scmp.ne.s32.totalorder %s81, %s95
      %p97 = scmp.eq.s32.totalorder %s29, 0
      %p98 = por %p96, %p97
      %s99 = ssub.s32 %s23, %s30
      %p100 = scmp.eq.s32.totalorder %s99, 0
      %s102 = sadd.s32 %s101, 1
      %s103 = scalar_select %p100, %s101, %s102
      %p106 = pneg %p100
      %p107 = scmp.eq.s32.totalorder %s23, 1
      %p108 = por %p106, %p107
      %p109 = scmp.ne.s32.totalorder %s101, %s104
      %p110 = scmp.eq.s32.totalorder %s23, 0
      %p111 = por %p109, %p110
      %p112 = scmp.ne.s32.totalorder %s101, %s104
      %p113 = scmp.eq.s32.totalorder %s28, 1
      %p114 = por %p112, %p113
      %p115 = scmp.ne.s32.totalorder %s104, %s105
      %p116 = scmp.eq.s32.totalorder %s28, 0
      %p117 = por %p115, %p116
      %p118 = scmp.ne.s32.totalorder %s104, %s105
      %p119 = scmp.eq.s32.totalorder %s29, 1
      %p120 = por %p118, %p119
      %p122 = scmp.ne.s32.totalorder %s105, %s121
      %p123 = scmp.eq.s32.totalorder %s29, 0
      %p124 = por %p122, %p123
      %s125 = ssub.s32 %s23, %s30
      %p126 = scmp.eq.s32.totalorder %s125, 0
      %s128 = sadd.s32 %s127, 1
      %s129 = scalar_select %p126, %s127, %s128
      %p132 = pneg %p126
      %p133 = scmp.eq.s32.totalorder %s23, 1
      %p134 = por %p132, %p133
      %p135 = scmp.ne.s32.totalorder %s127, %s130
      %p136 = scmp.eq.s32.totalorder %s23, 0
      %p137 = por %p135, %p136
      %p138 = scmp.ne.s32.totalorder %s127, %s130
      %p139 = scmp.eq.s32.totalorder %s28, 1
      %p140 = por %p138, %p139
      %p141 = scmp.ne.s32.totalorder %s130, %s131
      %p142 = scmp.eq.s32.totalorder %s28, 0
      %p143 = por %p141, %p142
      %p144 = scmp.ne.s32.totalorder %s130, %s131
      %p145 = scmp.eq.s32.totalorder %s29, 1
      %p146 = por %p144, %p145
      %p148 = scmp.ne.s32.totalorder %s131, %s147
      %p149 = scmp.eq.s32.totalorder %s29, 0
      %p150 = por %p148, %p149
      %p151 = scmp.le.s32.totalorder 1, %s23
      %p152 = scmp.lt.s32.totalorder %s23, 3
      %p153 = pnand %p151, %p152
      %p154 = pneg %p153
      // Predicated region
      $region9: #{sentiment_attention_forward.1} parent=5 // pred_check
        _
      $region10: #{sentiment_attention_forward.1} parent=5 // pred_check_branch
        %156 = sbr.rel (%p153) target = $region12
      $region11: #{sentiment_attention_forward.1} parent=5 // pred_region
        %s157 = ssub.s32 %s23, 1
        // Predicated region
        $region13: #{sentiment_attention_forward.1} parent=11 // pred_check
          %p158 = pneg %p70
        $region14: #{sentiment_attention_forward.1} parent=11 // pred_check_branch
          %160 = sbr.rel (%p158) target = $region16
        $region15: #{sentiment_attention_forward.1} parent=11 // pred_region
          %162 = vsyncadd [#allocation7], 0
          %s164 = sshll.u32 %s1, 4
          %s165 = int_to_ptr.hbm [resolvable:$true] %s164
          %s166 = sshll.u32 [#allocation6], 4
          %s167 = int_to_ptr.vmem [resolvable:$true] %s166
          %169 = dma.hbm_to_vmem [thread:$0]  %s165, 32, %s167, [#allocation7]
        $region16: #{sentiment_attention_forward.1} parent=11 // pred_fallthru
          _
        // Predicated region
        $region17: #{sentiment_attention_forward.1} parent=11 // pred_check
          %p170 = pneg %p91
        $region18: #{sentiment_attention_forward.1} parent=11 // pred_check_branch
          %172 = sbr.rel (%p170) target = $region20
        $region19: #{sentiment_attention_forward.1} parent=11 // pred_region
          _
        $region20: #{sentiment_attention_forward.1} parent=11 // pred_fallthru
          _
      $region12: #{sentiment_attention_forward.1} parent=5 // pred_fallthru
        _
      %p173 = scmp.lt.s32.totalorder %s23, 2
      // Predicated region
      $region21: #{sentiment_attention_forward.1} parent=5 // pred_check
        %p174 = pneg %p173
      $region22: #{sentiment_attention_forward.1} parent=5 // pred_check_branch
        %176 = sbr.rel (%p174) target = $region24
      $region23: #{sentiment_attention_forward.1} parent=5 // pred_region
        // Predicated region
        $region25: #{sentiment_attention_forward.1} parent=23 // pred_check
          %p177 = pneg %p43
        $region26: #{sentiment_attention_forward.1} parent=23 // pred_check_branch
          %179 = sbr.rel (%p177) target = $region28
        $region27: #{sentiment_attention_forward.1} parent=23 // pred_region
          %s180 = sand.u32 %s33, 1
          %s181 = scalar_lea.sflag [#allocation4], %s180
          %s182 = sand.u32 %s33, 1
          %s183 = smul.addr %s182, 2048
          %s184 = scalar_lea.vmem [#allocation3], %s183
          %s185 = smul.u32 8, %s23
          %187 = vsyncadd %s181, 0
          %s188 = smul.addr %s185, 32
          %s189 = smul.addr %s188, 8
          %s190 = scalar_lea.hbm %s0, %s189
          %s191 = sshll.u32 %s190, 4
          %s192 = int_to_ptr.hbm [resolvable:$true] %s191
          %s193 = sshll.u32 %s184, 4
          %s194 = int_to_ptr.vmem [resolvable:$true] %s193
          %199 = dma.hbm_to_vmem [thread:$0]  %s192, 32768, %s194, %s181, 256, 256, 16
        $region28: #{sentiment_attention_forward.1} parent=23 // pred_fallthru
          _
      $region24: #{sentiment_attention_forward.1} parent=5 // pred_fallthru
        _
      %p200 = scmp.le.s32.totalorder 1, %s23
      %p201 = scmp.lt.s32.totalorder %s23, 3
      %p202 = pnand %p200, %p201
      %p203 = pneg %p202
      // Predicated region
      $region29: #{sentiment_attention_forward.1} parent=5 // pred_check
        _
      $region30: #{sentiment_attention_forward.1} parent=5 // pred_check_branch
        %205 = sbr.rel (%p202) target = $region32
      $region31: #{sentiment_attention_forward.1} parent=5 // pred_region
        %s206 = ssub.s32 %s23, 1
        %s207 = sand.u32 %s36, 1
        %s208 = scalar_lea.sflag [#allocation4], %s207
        %s209 = sand.u32 %s36, 1
        %s210 = smul.addr %s209, 2048
        %s211 = scalar_lea.vmem [#allocation3], %s210
        // Predicated region
        $region33: #{sentiment_attention_forward.1} parent=31 // pred_check
          %p212 = pneg %p49
        $region34: #{sentiment_attention_forward.1} parent=31 // pred_check_branch
          %214 = sbr.rel (%p212) target = $region36
        $region35: #{sentiment_attention_forward.1} parent=31 // pred_region
          %216 = dma.done %s208, 32768
        $region36: #{sentiment_attention_forward.1} parent=31 // pred_fallthru
          _
        // Predicated region
        $region37: #{sentiment_attention_forward.1} parent=31 // pred_check
          %p217 = pneg %p70
        $region38: #{sentiment_attention_forward.1} parent=31 // pred_check_branch
          %219 = sbr.rel (%p217) target = $region40
        $region39: #{sentiment_attention_forward.1} parent=31 // pred_region
          %221 = dma.done [#allocation7], 32
        $region40: #{sentiment_attention_forward.1} parent=31 // pred_fallthru
          _
        %s222 = sand.u32 %s36, 1
        %s223 = scalar_lea.sflag [#allocation4], %s222
        %s224 = sand.u32 %s36, 1
        %s225 = smul.addr %s224, 2048
        %s226 = scalar_lea.vmem [#allocation3], %s225
        %p227 = pneg %p49
        %p228 = pneg %p46
        %p229 = pneg %p70
        %p230 = pneg %p67
        %p231 = pneg %p91
        %p232 = pneg %p88
        %p233 = pneg %p117
        %p234 = pneg %p114
        %s235 = sand.u32 %s104, 1
        %s236 = scalar_lea.sflag [#allocation5], %s235
        %s237 = sand.u32 %s104, 1
        %s238 = smul.addr %s237, 16
        %s239 = scalar_lea.vmem [#allocation8], %s238
        %p240 = pneg %p143
        %p241 = pneg %p140
        %s242 = sand.u32 %s130, 1
        %s243 = scalar_lea.sflag [#allocation10], %s242
        %s244 = sand.u32 %s130, 1
        %s245 = smul.addr %s244, 8
        %s246 = scalar_lea.vmem [#allocation9], %s245
        %s247 = smul.u32 8, %s28
        %v248 = vld [vmem:[%s211] sm:$0xff]
        %v249 = vld [vmem:[%s211 + $0x8] sm:$0xff]
        %v250 = vld [vmem:[%s211 + $0x10] sm:$0xff]
        %v251 = vld [vmem:[%s211 + $0x18] sm:$0xff]
        %v252 = vld [vmem:[%s211 + $0x20] sm:$0xff]
        %v253 = vld [vmem:[%s211 + $0x28] sm:$0xff]
        %v254 = vld [vmem:[%s211 + $0x30] sm:$0xff]
        %v255 = vld [vmem:[%s211 + $0x38] sm:$0xff]
        %v256 = vld [vmem:[%s211 + $0x40] sm:$0xff]
        %v257 = vld [vmem:[%s211 + $0x48] sm:$0xff]
        %v258 = vld [vmem:[%s211 + $0x50] sm:$0xff]
        %v259 = vld [vmem:[%s211 + $0x58] sm:$0xff]
        %v260 = vld [vmem:[%s211 + $0x60] sm:$0xff]
        %v261 = vld [vmem:[%s211 + $0x68] sm:$0xff]
        %v262 = vld [vmem:[%s211 + $0x70] sm:$0xff]
        %v263 = vld [vmem:[%s211 + $0x78] sm:$0xff]
        %v264 = vld [vmem:[%s211 + $0x80] sm:$0xff]
        %v265 = vld [vmem:[%s211 + $0x88] sm:$0xff]
        %v266 = vld [vmem:[%s211 + $0x90] sm:$0xff]
        %v267 = vld [vmem:[%s211 + $0x98] sm:$0xff]
        %v268 = vld [vmem:[%s211 + $0xa0] sm:$0xff]
        %v269 = vld [vmem:[%s211 + $0xa8] sm:$0xff]
        %v270 = vld [vmem:[%s211 + $0xb0] sm:$0xff]
        %v271 = vld [vmem:[%s211 + $0xb8] sm:$0xff]
        %v272 = vld [vmem:[%s211 + $0xc0] sm:$0xff]
        %v273 = vld [vmem:[%s211 + $0xc8] sm:$0xff]
        %v274 = vld [vmem:[%s211 + $0xd0] sm:$0xff]
        %v275 = vld [vmem:[%s211 + $0xd8] sm:$0xff]
        %v276 = vld [vmem:[%s211 + $0xe0] sm:$0xff]
        %v277 = vld [vmem:[%s211 + $0xe8] sm:$0xff]
        %v278 = vld [vmem:[%s211 + $0xf0] sm:$0xff]
        %v279 = vld [vmem:[%s211 + $0xf8] sm:$0xff]
        %v280 = vld [vmem:[%s211 + $0x100] sm:$0xff]
        %v281 = vld [vmem:[%s211 + $0x108] sm:$0xff]
        %v282 = vld [vmem:[%s211 + $0x110] sm:$0xff]
        %v283 = vld [vmem:[%s211 + $0x118] sm:$0xff]
        %v284 = vld [vmem:[%s211 + $0x120] sm:$0xff]
        %v285 = vld [vmem:[%s211 + $0x128] sm:$0xff]
        %v286 = vld [vmem:[%s211 + $0x130] sm:$0xff]
        %v287 = vld [vmem:[%s211 + $0x138] sm:$0xff]
        %v288 = vld [vmem:[%s211 + $0x140] sm:$0xff]
        %v289 = vld [vmem:[%s211 + $0x148] sm:$0xff]
        %v290 = vld [vmem:[%s211 + $0x150] sm:$0xff]
        %v291 = vld [vmem:[%s211 + $0x158] sm:$0xff]
        %v292 = vld [vmem:[%s211 + $0x160] sm:$0xff]
        %v293 = vld [vmem:[%s211 + $0x168] sm:$0xff]
        %v294 = vld [vmem:[%s211 + $0x170] sm:$0xff]
        %v295 = vld [vmem:[%s211 + $0x178] sm:$0xff]
        %v296 = vld [vmem:[%s211 + $0x180] sm:$0xff]
        %v297 = vld [vmem:[%s211 + $0x188] sm:$0xff]
        %v298 = vld [vmem:[%s211 + $0x190] sm:$0xff]
        %v299 = vld [vmem:[%s211 + $0x198] sm:$0xff]
        %v300 = vld [vmem:[%s211 + $0x1a0] sm:$0xff]
        %v301 = vld [vmem:[%s211 + $0x1a8] sm:$0xff]
        %v302 = vld [vmem:[%s211 + $0x1b0] sm:$0xff]
        %v303 = vld [vmem:[%s211 + $0x1b8] sm:$0xff]
        %v304 = vld [vmem:[%s211 + $0x1c0] sm:$0xff]
        %v305 = vld [vmem:[%s211 + $0x1c8] sm:$0xff]
        %v306 = vld [vmem:[%s211 + $0x1d0] sm:$0xff]
        %v307 = vld [vmem:[%s211 + $0x1d8] sm:$0xff]
        %v308 = vld [vmem:[%s211 + $0x1e0] sm:$0xff]
        %v309 = vld [vmem:[%s211 + $0x1e8] sm:$0xff]
        %v310 = vld [vmem:[%s211 + $0x1f0] sm:$0xff]
        %v311 = vld [vmem:[%s211 + $0x1f8] sm:$0xff]
        %v312 = vld [vmem:[%s211 + $0x200] sm:$0xff]
        %v313 = vld [vmem:[%s211 + $0x208] sm:$0xff]
        %v314 = vld [vmem:[%s211 + $0x210] sm:$0xff]
        %v315 = vld [vmem:[%s211 + $0x218] sm:$0xff]
        %v316 = vld [vmem:[%s211 + $0x220] sm:$0xff]
        %v317 = vld [vmem:[%s211 + $0x228] sm:$0xff]
        %v318 = vld [vmem:[%s211 + $0x230] sm:$0xff]
        %v319 = vld [vmem:[%s211 + $0x238] sm:$0xff]
        %v320 = vld [vmem:[%s211 + $0x240] sm:$0xff]
        %v321 = vld [vmem:[%s211 + $0x248] sm:$0xff]
        %v322 = vld [vmem:[%s211 + $0x250] sm:$0xff]
        %v323 = vld [vmem:[%s211 + $0x258] sm:$0xff]
        %v324 = vld [vmem:[%s211 + $0x260] sm:$0xff]
        %v325 = vld [vmem:[%s211 + $0x268] sm:$0xff]
        %v326 = vld [vmem:[%s211 + $0x270] sm:$0xff]
        %v327 = vld [vmem:[%s211 + $0x278] sm:$0xff]
        %v328 = vld [vmem:[%s211 + $0x280] sm:$0xff]
        %v329 = vld [vmem:[%s211 + $0x288] sm:$0xff]
        %v330 = vld [vmem:[%s211 + $0x290] sm:$0xff]
        %v331 = vld [vmem:[%s211 + $0x298] sm:$0xff]
        %v332 = vld [vmem:[%s211 + $0x2a0] sm:$0xff]
        %v333 = vld [vmem:[%s211 + $0x2a8] sm:$0xff]
        %v334 = vld [vmem:[%s211 + $0x2b0] sm:$0xff]
        %v335 = vld [vmem:[%s211 + $0x2b8] sm:$0xff]
        %v336 = vld [vmem:[%s211 + $0x2c0] sm:$0xff]
        %v337 = vld [vmem:[%s211 + $0x2c8] sm:$0xff]
        %v338 = vld [vmem:[%s211 + $0x2d0] sm:$0xff]
        %v339 = vld [vmem:[%s211 + $0x2d8] sm:$0xff]
        %v340 = vld [vmem:[%s211 + $0x2e0] sm:$0xff]
        %v341 = vld [vmem:[%s211 + $0x2e8] sm:$0xff]
        %v342 = vld [vmem:[%s211 + $0x2f0] sm:$0xff]
        %v343 = vld [vmem:[%s211 + $0x2f8] sm:$0xff]
        %v344 = vld [vmem:[%s211 + $0x300] sm:$0xff]
        %v345 = vld [vmem:[%s211 + $0x308] sm:$0xff]
        %v346 = vld [vmem:[%s211 + $0x310] sm:$0xff]
        %v347 = vld [vmem:[%s211 + $0x318] sm:$0xff]
        %v348 = vld [vmem:[%s211 + $0x320] sm:$0xff]
        %v349 = vld [vmem:[%s211 + $0x328] sm:$0xff]
        %v350 = vld [vmem:[%s211 + $0x330] sm:$0xff]
        %v351 = vld [vmem:[%s211 + $0x338] sm:$0xff]
        %v352 = vld [vmem:[%s211 + $0x340] sm:$0xff]
        %v353 = vld [vmem:[%s211 + $0x348] sm:$0xff]
        %v354 = vld [vmem:[%s211 + $0x350] sm:$0xff]
        %v355 = vld [vmem:[%s211 + $0x358] sm:$0xff]
        %v356 = vld [vmem:[%s211 + $0x360] sm:$0xff]
        %v357 = vld [vmem:[%s211 + $0x368] sm:$0xff]
        %v358 = vld [vmem:[%s211 + $0x370] sm:$0xff]
        %v359 = vld [vmem:[%s211 + $0x378] sm:$0xff]
        %v360 = vld [vmem:[%s211 + $0x380] sm:$0xff]
        %v361 = vld [vmem:[%s211 + $0x388] sm:$0xff]
        %v362 = vld [vmem:[%s211 + $0x390] sm:$0xff]
        %v363 = vld [vmem:[%s211 + $0x398] sm:$0xff]
        %v364 = vld [vmem:[%s211 + $0x3a0] sm:$0xff]
        %v365 = vld [vmem:[%s211 + $0x3a8] sm:$0xff]
        %v366 = vld [vmem:[%s211 + $0x3b0] sm:$0xff]
        %v367 = vld [vmem:[%s211 + $0x3b8] sm:$0xff]
        %v368 = vld [vmem:[%s211 + $0x3c0] sm:$0xff]
        %v369 = vld [vmem:[%s211 + $0x3c8] sm:$0xff]
        %v370 = vld [vmem:[%s211 + $0x3d0] sm:$0xff]
        %v371 = vld [vmem:[%s211 + $0x3d8] sm:$0xff]
        %v372 = vld [vmem:[%s211 + $0x3e0] sm:$0xff]
        %v373 = vld [vmem:[%s211 + $0x3e8] sm:$0xff]
        %v374 = vld [vmem:[%s211 + $0x3f0] sm:$0xff]
        %v375 = vld [vmem:[%s211 + $0x3f8] sm:$0xff]
        %v376 = vld [vmem:[%s211 + $0x400] sm:$0xff]
        %v377 = vld [vmem:[%s211 + $0x408] sm:$0xff]
        %v378 = vld [vmem:[%s211 + $0x410] sm:$0xff]
        %v379 = vld [vmem:[%s211 + $0x418] sm:$0xff]
        %v380 = vld [vmem:[%s211 + $0x420] sm:$0xff]
        %v381 = vld [vmem:[%s211 + $0x428] sm:$0xff]
        %v382 = vld [vmem:[%s211 + $0x430] sm:$0xff]
        %v383 = vld [vmem:[%s211 + $0x438] sm:$0xff]
        %v384 = vld [vmem:[%s211 + $0x440] sm:$0xff]
        %v385 = vld [vmem:[%s211 + $0x448] sm:$0xff]
        %v386 = vld [vmem:[%s211 + $0x450] sm:$0xff]
        %v387 = vld [vmem:[%s211 + $0x458] sm:$0xff]
        %v388 = vld [vmem:[%s211 + $0x460] sm:$0xff]
        %v389 = vld [vmem:[%s211 + $0x468] sm:$0xff]
        %v390 = vld [vmem:[%s211 + $0x470] sm:$0xff]
        %v391 = vld [vmem:[%s211 + $0x478] sm:$0xff]
        %v392 = vld [vmem:[%s211 + $0x480] sm:$0xff]
        %v393 = vld [vmem:[%s211 + $0x488] sm:$0xff]
        %v394 = vld [vmem:[%s211 + $0x490] sm:$0xff]
        %v395 = vld [vmem:[%s211 + $0x498] sm:$0xff]
        %v396 = vld [vmem:[%s211 + $0x4a0] sm:$0xff]
        %v397 = vld [vmem:[%s211 + $0x4a8] sm:$0xff]
        %v398 = vld [vmem:[%s211 + $0x4b0] sm:$0xff]
        %v399 = vld [vmem:[%s211 + $0x4b8] sm:$0xff]
        %v400 = vld [vmem:[%s211 + $0x4c0] sm:$0xff]
        %v401 = vld [vmem:[%s211 + $0x4c8] sm:$0xff]
        %v402 = vld [vmem:[%s211 + $0x4d0] sm:$0xff]
        %v403 = vld [vmem:[%s211 + $0x4d8] sm:$0xff]
        %v404 = vld [vmem:[%s211 + $0x4e0] sm:$0xff]
        %v405 = vld [vmem:[%s211 + $0x4e8] sm:$0xff]
        %v406 = vld [vmem:[%s211 + $0x4f0] sm:$0xff]
        %v407 = vld [vmem:[%s211 + $0x4f8] sm:$0xff]
        %v408 = vld [vmem:[%s211 + $0x500] sm:$0xff]
        %v409 = vld [vmem:[%s211 + $0x508] sm:$0xff]
        %v410 = vld [vmem:[%s211 + $0x510] sm:$0xff]
        %v411 = vld [vmem:[%s211 + $0x518] sm:$0xff]
        %v412 = vld [vmem:[%s211 + $0x520] sm:$0xff]
        %v413 = vld [vmem:[%s211 + $0x528] sm:$0xff]
        %v414 = vld [vmem:[%s211 + $0x530] sm:$0xff]
        %v415 = vld [vmem:[%s211 + $0x538] sm:$0xff]
        %v416 = vld [vmem:[%s211 + $0x540] sm:$0xff]
        %v417 = vld [vmem:[%s211 + $0x548] sm:$0xff]
        %v418 = vld [vmem:[%s211 + $0x550] sm:$0xff]
        %v419 = vld [vmem:[%s211 + $0x558] sm:$0xff]
        %v420 = vld [vmem:[%s211 + $0x560] sm:$0xff]
        %v421 = vld [vmem:[%s211 + $0x568] sm:$0xff]
        %v422 = vld [vmem:[%s211 + $0x570] sm:$0xff]
        %v423 = vld [vmem:[%s211 + $0x578] sm:$0xff]
        %v424 = vld [vmem:[%s211 + $0x580] sm:$0xff]
        %v425 = vld [vmem:[%s211 + $0x588] sm:$0xff]
        %v426 = vld [vmem:[%s211 + $0x590] sm:$0xff]
        %v427 = vld [vmem:[%s211 + $0x598] sm:$0xff]
        %v428 = vld [vmem:[%s211 + $0x5a0] sm:$0xff]
        %v429 = vld [vmem:[%s211 + $0x5a8] sm:$0xff]
        %v430 = vld [vmem:[%s211 + $0x5b0] sm:$0xff]
        %v431 = vld [vmem:[%s211 + $0x5b8] sm:$0xff]
        %v432 = vld [vmem:[%s211 + $0x5c0] sm:$0xff]
        %v433 = vld [vmem:[%s211 + $0x5c8] sm:$0xff]
        %v434 = vld [vmem:[%s211 + $0x5d0] sm:$0xff]
        %v435 = vld [vmem:[%s211 + $0x5d8] sm:$0xff]
        %v436 = vld [vmem:[%s211 + $0x5e0] sm:$0xff]
        %v437 = vld [vmem:[%s211 + $0x5e8] sm:$0xff]
        %v438 = vld [vmem:[%s211 + $0x5f0] sm:$0xff]
        %v439 = vld [vmem:[%s211 + $0x5f8] sm:$0xff]
        %v440 = vld [vmem:[%s211 + $0x600] sm:$0xff]
        %v441 = vld [vmem:[%s211 + $0x608] sm:$0xff]
        %v442 = vld [vmem:[%s211 + $0x610] sm:$0xff]
        %v443 = vld [vmem:[%s211 + $0x618] sm:$0xff]
        %v444 = vld [vmem:[%s211 + $0x620] sm:$0xff]
        %v445 = vld [vmem:[%s211 + $0x628] sm:$0xff]
        %v446 = vld [vmem:[%s211 + $0x630] sm:$0xff]
        %v447 = vld [vmem:[%s211 + $0x638] sm:$0xff]
        %v448 = vld [vmem:[%s211 + $0x640] sm:$0xff]
        %v449 = vld [vmem:[%s211 + $0x648] sm:$0xff]
        %v450 = vld [vmem:[%s211 + $0x650] sm:$0xff]
        %v451 = vld [vmem:[%s211 + $0x658] sm:$0xff]
        %v452 = vld [vmem:[%s211 + $0x660] sm:$0xff]
        %v453 = vld [vmem:[%s211 + $0x668] sm:$0xff]
        %v454 = vld [vmem:[%s211 + $0x670] sm:$0xff]
        %v455 = vld [vmem:[%s211 + $0x678] sm:$0xff]
        %v456 = vld [vmem:[%s211 + $0x680] sm:$0xff]
        %v457 = vld [vmem:[%s211 + $0x688] sm:$0xff]
        %v458 = vld [vmem:[%s211 + $0x690] sm:$0xff]
        %v459 = vld [vmem:[%s211 + $0x698] sm:$0xff]
        %v460 = vld [vmem:[%s211 + $0x6a0] sm:$0xff]
        %v461 = vld [vmem:[%s211 + $0x6a8] sm:$0xff]
        %v462 = vld [vmem:[%s211 + $0x6b0] sm:$0xff]
        %v463 = vld [vmem:[%s211 + $0x6b8] sm:$0xff]
        %v464 = vld [vmem:[%s211 + $0x6c0] sm:$0xff]
        %v465 = vld [vmem:[%s211 + $0x6c8] sm:$0xff]
        %v466 = vld [vmem:[%s211 + $0x6d0] sm:$0xff]
        %v467 = vld [vmem:[%s211 + $0x6d8] sm:$0xff]
        %v468 = vld [vmem:[%s211 + $0x6e0] sm:$0xff]
        %v469 = vld [vmem:[%s211 + $0x6e8] sm:$0xff]
        %v470 = vld [vmem:[%s211 + $0x6f0] sm:$0xff]
        %v471 = vld [vmem:[%s211 + $0x6f8] sm:$0xff]
        %v472 = vld [vmem:[%s211 + $0x700] sm:$0xff]
        %v473 = vld [vmem:[%s211 + $0x708] sm:$0xff]
        %v474 = vld [vmem:[%s211 + $0x710] sm:$0xff]
        %v475 = vld [vmem:[%s211 + $0x718] sm:$0xff]
        %v476 = vld [vmem:[%s211 + $0x720] sm:$0xff]
        %v477 = vld [vmem:[%s211 + $0x728] sm:$0xff]
        %v478 = vld [vmem:[%s211 + $0x730] sm:$0xff]
        %v479 = vld [vmem:[%s211 + $0x738] sm:$0xff]
        %v480 = vld [vmem:[%s211 + $0x740] sm:$0xff]
        %v481 = vld [vmem:[%s211 + $0x748] sm:$0xff]
        %v482 = vld [vmem:[%s211 + $0x750] sm:$0xff]
        %v483 = vld [vmem:[%s211 + $0x758] sm:$0xff]
        %v484 = vld [vmem:[%s211 + $0x760] sm:$0xff]
        %v485 = vld [vmem:[%s211 + $0x768] sm:$0xff]
        %v486 = vld [vmem:[%s211 + $0x770] sm:$0xff]
        %v487 = vld [vmem:[%s211 + $0x778] sm:$0xff]
        %v488 = vld [vmem:[%s211 + $0x780] sm:$0xff]
        %v489 = vld [vmem:[%s211 + $0x788] sm:$0xff]
        %v490 = vld [vmem:[%s211 + $0x790] sm:$0xff]
        %v491 = vld [vmem:[%s211 + $0x798] sm:$0xff]
        %v492 = vld [vmem:[%s211 + $0x7a0] sm:$0xff]
        %v493 = vld [vmem:[%s211 + $0x7a8] sm:$0xff]
        %v494 = vld [vmem:[%s211 + $0x7b0] sm:$0xff]
        %v495 = vld [vmem:[%s211 + $0x7b8] sm:$0xff]
        %v496 = vld [vmem:[%s211 + $0x7c0] sm:$0xff]
        %v497 = vld [vmem:[%s211 + $0x7c8] sm:$0xff]
        %v498 = vld [vmem:[%s211 + $0x7d0] sm:$0xff]
        %v499 = vld [vmem:[%s211 + $0x7d8] sm:$0xff]
        %v500 = vld [vmem:[%s211 + $0x7e0] sm:$0xff]
        %v501 = vld [vmem:[%s211 + $0x7e8] sm:$0xff]
        %v502 = vld [vmem:[%s211 + $0x7f0] sm:$0xff]
        %v503 = vld [vmem:[%s211 + $0x7f8] sm:$0xff]
        %v504 = vld [vmem:[#allocation6] sm:$0x3]
        %v505 = vld [vmem:[#allocation2] sm:$0x1]
        %s506 = vtos %v505
        %v507 = vstv %s506
        %v509 = vperm.slane %v504, 0
        %v510 = vperm.slane %v504, 1
        %513 = vmatpush.xpose.msra.mxu0 %v278
        %514 = vmatpush.xpose.msra.mxu0 %v276
        %515 = vmatpush.xpose.msra.mxu0 %v274
        %516 = vmatpush.xpose.msra.mxu0 %v272
        %517 = vmatpush.xpose.msra.mxu0 %v270
        %518 = vmatpush.xpose.msra.mxu0 %v268
        %519 = vmatpush.xpose.msra.mxu0 %v266
        %520 = vmatpush.xpose.msra.mxu0 %v264
        %521 = vmatpush.xpose.msra.mxu0 %v262
        %522 = vmatpush.xpose.msra.mxu0 %v260
        %523 = vmatpush.xpose.msra.mxu0 %v258
        %524 = vmatpush.xpose.msra.mxu0 %v256
        %525 = vmatpush.xpose.msra.mxu0 %v254
        %526 = vmatpush.xpose.msra.mxu0 %v252
        %527 = vmatpush.xpose.msra.mxu0 %v250
        %528 = vmatpush.xpose.msra.mxu0 %v248
        %529 = vmatmul.f32.gmra.mxu0 %v509
        %v530 = vpop.f32.mrf.mxu0
        %v531 = vadd.f32 %v507, %v530
        %532 = vdwg.mxu0
        %533 = vmatpush.xpose.msra.mxu0 %v279
        %534 = vmatpush.xpose.msra.mxu0 %v277
        %535 = vmatpush.xpose.msra.mxu0 %v275
        %536 = vmatpush.xpose.msra.mxu0 %v273
        %537 = vmatpush.xpose.msra.mxu0 %v271
        %538 = vmatpush.xpose.msra.mxu0 %v269
        %539 = vmatpush.xpose.msra.mxu0 %v267
        %540 = vmatpush.xpose.msra.mxu0 %v265
        %541 = vmatpush.xpose.msra.mxu0 %v263
        %542 = vmatpush.xpose.msra.mxu0 %v261
        %543 = vmatpush.xpose.msra.mxu0 %v259
        %544 = vmatpush.xpose.msra.mxu0 %v257
        %545 = vmatpush.xpose.msra.mxu0 %v255
        %546 = vmatpush.xpose.msra.mxu0 %v253
        %547 = vmatpush.xpose.msra.mxu0 %v251
        %548 = vmatpush.xpose.msra.mxu0 %v249
        %549 = vmatmul.f32.gmra.mxu0 %v510
        %v550 = vpop.f32.mrf.mxu0
        %v551 = vadd.f32 %v531, %v550
        %552 = vdwg.mxu0
        %553 = vmatpush.xpose.msra.mxu0 %v310
        %554 = vmatpush.xpose.msra.mxu0 %v308
        %555 = vmatpush.xpose.msra.mxu0 %v306
        %556 = vmatpush.xpose.msra.mxu0 %v304
        %557 = vmatpush.xpose.msra.mxu0 %v302
        %558 = vmatpush.xpose.msra.mxu0 %v300
        %559 = vmatpush.xpose.msra.mxu0 %v298
        %560 = vmatpush.xpose.msra.mxu0 %v296
        %561 = vmatpush.xpose.msra.mxu0 %v294
        %562 = vmatpush.xpose.msra.mxu0 %v292
        %563 = vmatpush.xpose.msra.mxu0 %v290
        %564 = vmatpush.xpose.msra.mxu0 %v288
        %565 = vmatpush.xpose.msra.mxu0 %v286
        %566 = vmatpush.xpose.msra.mxu0 %v284
        %567 = vmatpush.xpose.msra.mxu0 %v282
        %568 = vmatpush.xpose.msra.mxu0 %v280
        %569 = vmatmul.f32.gmra.mxu0 %v509
        %v570 = vpop.f32.mrf.mxu0
        %v571 = vadd.f32 %v507, %v570
        %572 = vdwg.mxu0
        %573 = vmatpush.xpose.msra.mxu0 %v311
        %574 = vmatpush.xpose.msra.mxu0 %v309
        %575 = vmatpush.xpose.msra.mxu0 %v307
        %576 = vmatpush.xpose.msra.mxu0 %v305
        %577 = vmatpush.xpose.msra.mxu0 %v303
        %578 = vmatpush.xpose.msra.mxu0 %v301
        %579 = vmatpush.xpose.msra.mxu0 %v299
        %580 = vmatpush.xpose.msra.mxu0 %v297
        %581 = vmatpush.xpose.msra.mxu0 %v295
        %582 = vmatpush.xpose.msra.mxu0 %v293
        %583 = vmatpush.xpose.msra.mxu0 %v291
        %584 = vmatpush.xpose.msra.mxu0 %v289
        %585 = vmatpush.xpose.msra.mxu0 %v287
        %586 = vmatpush.xpose.msra.mxu0 %v285
        %587 = vmatpush.xpose.msra.mxu0 %v283
        %588 = vmatpush.xpose.msra.mxu0 %v281
        %589 = vmatmul.f32.gmra.mxu0 %v510
        %v590 = vpop.f32.mrf.mxu0
        %v591 = vadd.f32 %v571, %v590
        %592 = vdwg.mxu0
        %593 = vmatpush.xpose.msra.mxu0 %v342
        %594 = vmatpush.xpose.msra.mxu0 %v340
        %595 = vmatpush.xpose.msra.mxu0 %v338
        %596 = vmatpush.xpose.msra.mxu0 %v336
        %597 = vmatpush.xpose.msra.mxu0 %v334
        %598 = vmatpush.xpose.msra.mxu0 %v332
        %599 = vmatpush.xpose.msra.mxu0 %v330
        %600 = vmatpush.xpose.msra.mxu0 %v328
        %601 = vmatpush.xpose.msra.mxu0 %v326
        %602 = vmatpush.xpose.msra.mxu0 %v324
        %603 = vmatpush.xpose.msra.mxu0 %v322
        %604 = vmatpush.xpose.msra.mxu0 %v320
        %605 = vmatpush.xpose.msra.mxu0 %v318
        %606 = vmatpush.xpose.msra.mxu0 %v316
        %607 = vmatpush.xpose.msra.mxu0 %v314
        %608 = vmatpush.xpose.msra.mxu0 %v312
        %609 = vmatmul.f32.gmra.mxu0 %v509
        %v610 = vpop.f32.mrf.mxu0
        %v611 = vadd.f32 %v507, %v610
        %612 = vdwg.mxu0
        %613 = vmatpush.xpose.msra.mxu0 %v343
        %614 = vmatpush.xpose.msra.mxu0 %v341
        %615 = vmatpush.xpose.msra.mxu0 %v339
        %616 = vmatpush.xpose.msra.mxu0 %v337
        %617 = vmatpush.xpose.msra.mxu0 %v335
        %618 = vmatpush.xpose.msra.mxu0 %v333
        %619 = vmatpush.xpose.msra.mxu0 %v331
        %620 = vmatpush.xpose.msra.mxu0 %v329
        %621 = vmatpush.xpose.msra.mxu0 %v327
        %622 = vmatpush.xpose.msra.mxu0 %v325
        %623 = vmatpush.xpose.msra.mxu0 %v323
        %624 = vmatpush.xpose.msra.mxu0 %v321
        %625 = vmatpush.xpose.msra.mxu0 %v319
        %626 = vmatpush.xpose.msra.mxu0 %v317
        %627 = vmatpush.xpose.msra.mxu0 %v315
        %628 = vmatpush.xpose.msra.mxu0 %v313
        %629 = vmatmul.f32.gmra.mxu0 %v510
        %v630 = vpop.f32.mrf.mxu0
        %v631 = vadd.f32 %v611, %v630
        %632 = vdwg.mxu0
        %633 = vmatpush.xpose.msra.mxu0 %v374
        %634 = vmatpush.xpose.msra.mxu0 %v372
        %635 = vmatpush.xpose.msra.mxu0 %v370
        %636 = vmatpush.xpose.msra.mxu0 %v368
        %637 = vmatpush.xpose.msra.mxu0 %v366
        %638 = vmatpush.xpose.msra.mxu0 %v364
        %639 = vmatpush.xpose.msra.mxu0 %v362
        %640 = vmatpush.xpose.msra.mxu0 %v360
        %641 = vmatpush.xpose.msra.mxu0 %v358
        %642 = vmatpush.xpose.msra.mxu0 %v356
        %643 = vmatpush.xpose.msra.mxu0 %v354
        %644 = vmatpush.xpose.msra.mxu0 %v352
        %645 = vmatpush.xpose.msra.mxu0 %v350
        %646 = vmatpush.xpose.msra.mxu0 %v348
        %647 = vmatpush.xpose.msra.mxu0 %v346
        %648 = vmatpush.xpose.msra.mxu0 %v344
        %649 = vmatmul.f32.gmra.mxu0 %v509
        %v650 = vpop.f32.mrf.mxu0
        %v651 = vadd.f32 %v507, %v650
        %652 = vdwg.mxu0
        %653 = vmatpush.xpose.msra.mxu0 %v375
        %654 = vmatpush.xpose.msra.mxu0 %v373
        %655 = vmatpush.xpose.msra.mxu0 %v371
        %656 = vmatpush.xpose.msra.mxu0 %v369
        %657 = vmatpush.xpose.msra.mxu0 %v367
        %658 = vmatpush.xpose.msra.mxu0 %v365
        %659 = vmatpush.xpose.msra.mxu0 %v363
        %660 = vmatpush.xpose.msra.mxu0 %v361
        %661 = vmatpush.xpose.msra.mxu0 %v359
        %662 = vmatpush.xpose.msra.mxu0 %v357
        %663 = vmatpush.xpose.msra.mxu0 %v355
        %664 = vmatpush.xpose.msra.mxu0 %v353
        %665 = vmatpush.xpose.msra.mxu0 %v351
        %666 = vmatpush.xpose.msra.mxu0 %v349
        %667 = vmatpush.xpose.msra.mxu0 %v347
        %668 = vmatpush.xpose.msra.mxu0 %v345
        %669 = vmatmul.f32.gmra.mxu0 %v510
        %v670 = vpop.f32.mrf.mxu0
        %v671 = vadd.f32 %v651, %v670
        %672 = vdwg.mxu0
        %673 = vmatpush.xpose.msra.mxu0 %v406
        %674 = vmatpush.xpose.msra.mxu0 %v404
        %675 = vmatpush.xpose.msra.mxu0 %v402
        %676 = vmatpush.xpose.msra.mxu0 %v400
        %677 = vmatpush.xpose.msra.mxu0 %v398
        %678 = vmatpush.xpose.msra.mxu0 %v396
        %679 = vmatpush.xpose.msra.mxu0 %v394
        %680 = vmatpush.xpose.msra.mxu0 %v392
        %681 = vmatpush.xpose.msra.mxu0 %v390
        %682 = vmatpush.xpose.msra.mxu0 %v388
        %683 = vmatpush.xpose.msra.mxu0 %v386
        %684 = vmatpush.xpose.msra.mxu0 %v384
        %685 = vmatpush.xpose.msra.mxu0 %v382
        %686 = vmatpush.xpose.msra.mxu0 %v380
        %687 = vmatpush.xpose.msra.mxu0 %v378
        %688 = vmatpush.xpose.msra.mxu0 %v376
        %689 = vmatmul.f32.gmra.mxu0 %v509
        %v690 = vpop.f32.mrf.mxu0
        %v691 = vadd.f32 %v507, %v690
        %692 = vdwg.mxu0
        %693 = vmatpush.xpose.msra.mxu0 %v407
        %694 = vmatpush.xpose.msra.mxu0 %v405
        %695 = vmatpush.xpose.msra.mxu0 %v403
        %696 = vmatpush.xpose.msra.mxu0 %v401
        %697 = vmatpush.xpose.msra.mxu0 %v399
        %698 = vmatpush.xpose.msra.mxu0 %v397
        %699 = vmatpush.xpose.msra.mxu0 %v395
        %700 = vmatpush.xpose.msra.mxu0 %v393
        %701 = vmatpush.xpose.msra.mxu0 %v391
        %702 = vmatpush.xpose.msra.mxu0 %v389
        %703 = vmatpush.xpose.msra.mxu0 %v387
        %704 = vmatpush.xpose.msra.mxu0 %v385
        %705 = vmatpush.xpose.msra.mxu0 %v383
        %706 = vmatpush.xpose.msra.mxu0 %v381
        %707 = vmatpush.xpose.msra.mxu0 %v379
        %708 = vmatpush.xpose.msra.mxu0 %v377
        %709 = vmatmul.f32.gmra.mxu0 %v510
        %v710 = vpop.f32.mrf.mxu0
        %v711 = vadd.f32 %v691, %v710
        %712 = vdwg.mxu0
        %713 = vmatpush.xpose.msra.mxu0 %v438
        %714 = vmatpush.xpose.msra.mxu0 %v436
        %715 = vmatpush.xpose.msra.mxu0 %v434
        %716 = vmatpush.xpose.msra.mxu0 %v432
        %717 = vmatpush.xpose.msra.mxu0 %v430
        %718 = vmatpush.xpose.msra.mxu0 %v428
        %719 = vmatpush.xpose.msra.mxu0 %v426
        %720 = vmatpush.xpose.msra.mxu0 %v424
        %721 = vmatpush.xpose.msra.mxu0 %v422
        %722 = vmatpush.xpose.msra.mxu0 %v420
        %723 = vmatpush.xpose.msra.mxu0 %v418
        %724 = vmatpush.xpose.msra.mxu0 %v416
        %725 = vmatpush.xpose.msra.mxu0 %v414
        %726 = vmatpush.xpose.msra.mxu0 %v412
        %727 = vmatpush.xpose.msra.mxu0 %v410
        %728 = vmatpush.xpose.msra.mxu0 %v408
        %729 = vmatmul.f32.gmra.mxu0 %v509
        %v730 = vpop.f32.mrf.mxu0
        %v731 = vadd.f32 %v507, %v730
        %732 = vdwg.mxu0
        %733 = vmatpush.xpose.msra.mxu0 %v439
        %734 = vmatpush.xpose.msra.mxu0 %v437
        %735 = vmatpush.xpose.msra.mxu0 %v435
        %736 = vmatpush.xpose.msra.mxu0 %v433
        %737 = vmatpush.xpose.msra.mxu0 %v431
        %738 = vmatpush.xpose.msra.mxu0 %v429
        %739 = vmatpush.xpose.msra.mxu0 %v427
        %740 = vmatpush.xpose.msra.mxu0 %v425
        %741 = vmatpush.xpose.msra.mxu0 %v423
        %742 = vmatpush.xpose.msra.mxu0 %v421
        %743 = vmatpush.xpose.msra.mxu0 %v419
        %744 = vmatpush.xpose.msra.mxu0 %v417
        %745 = vmatpush.xpose.msra.mxu0 %v415
        %746 = vmatpush.xpose.msra.mxu0 %v413
        %747 = vmatpush.xpose.msra.mxu0 %v411
        %748 = vmatpush.xpose.msra.mxu0 %v409
        %749 = vmatmul.f32.gmra.mxu0 %v510
        %v750 = vpop.f32.mrf.mxu0
        %v751 = vadd.f32 %v731, %v750
        %752 = vdwg.mxu0
        %753 = vmatpush.xpose.msra.mxu0 %v470
        %754 = vmatpush.xpose.msra.mxu0 %v468
        %755 = vmatpush.xpose.msra.mxu0 %v466
        %756 = vmatpush.xpose.msra.mxu0 %v464
        %757 = vmatpush.xpose.msra.mxu0 %v462
        %758 = vmatpush.xpose.msra.mxu0 %v460
        %759 = vmatpush.xpose.msra.mxu0 %v458
        %760 = vmatpush.xpose.msra.mxu0 %v456
        %761 = vmatpush.xpose.msra.mxu0 %v454
        %762 = vmatpush.xpose.msra.mxu0 %v452
        %763 = vmatpush.xpose.msra.mxu0 %v450
        %764 = vmatpush.xpose.msra.mxu0 %v448
        %765 = vmatpush.xpose.msra.mxu0 %v446
        %766 = vmatpush.xpose.msra.mxu0 %v444
        %767 = vmatpush.xpose.msra.mxu0 %v442
        %768 = vmatpush.xpose.msra.mxu0 %v440
        %769 = vmatmul.f32.gmra.mxu0 %v509
        %v770 = vpop.f32.mrf.mxu0
        %v771 = vadd.f32 %v507, %v770
        %772 = vdwg.mxu0
        %773 = vmatpush.xpose.msra.mxu0 %v471
        %774 = vmatpush.xpose.msra.mxu0 %v469
        %775 = vmatpush.xpose.msra.mxu0 %v467
        %776 = vmatpush.xpose.msra.mxu0 %v465
        %777 = vmatpush.xpose.msra.mxu0 %v463
        %778 = vmatpush.xpose.msra.mxu0 %v461
        %779 = vmatpush.xpose.msra.mxu0 %v459
        %780 = vmatpush.xpose.msra.mxu0 %v457
        %781 = vmatpush.xpose.msra.mxu0 %v455
        %782 = vmatpush.xpose.msra.mxu0 %v453
        %783 = vmatpush.xpose.msra.mxu0 %v451
        %784 = vmatpush.xpose.msra.mxu0 %v449
        %785 = vmatpush.xpose.msra.mxu0 %v447
        %786 = vmatpush.xpose.msra.mxu0 %v445
        %787 = vmatpush.xpose.msra.mxu0 %v443
        %788 = vmatpush.xpose.msra.mxu0 %v441
        %789 = vmatmul.f32.gmra.mxu0 %v510
        %v790 = vpop.f32.mrf.mxu0
        %v791 = vadd.f32 %v771, %v790
        %792 = vdwg.mxu0
        %793 = vmatpush.xpose.msra.mxu0 %v502
        %794 = vmatpush.xpose.msra.mxu0 %v500
        %795 = vmatpush.xpose.msra.mxu0 %v498
        %796 = vmatpush.xpose.msra.mxu0 %v496
        %797 = vmatpush.xpose.msra.mxu0 %v494
        %798 = vmatpush.xpose.msra.mxu0 %v492
        %799 = vmatpush.xpose.msra.mxu0 %v490
        %800 = vmatpush.xpose.msra.mxu0 %v488
        %801 = vmatpush.xpose.msra.mxu0 %v486
        %802 = vmatpush.xpose.msra.mxu0 %v484
        %803 = vmatpush.xpose.msra.mxu0 %v482
        %804 = vmatpush.xpose.msra.mxu0 %v480
        %805 = vmatpush.xpose.msra.mxu0 %v478
        %806 = vmatpush.xpose.msra.mxu0 %v476
        %807 = vmatpush.xpose.msra.mxu0 %v474
        %808 = vmatpush.xpose.msra.mxu0 %v472
        %809 = vmatmul.f32.gmra.mxu0 %v509
        %v810 = vpop.f32.mrf.mxu0
        %v811 = vadd.f32 %v507, %v810
        %812 = vdwg.mxu0
        %813 = vmatpush.xpose.msra.mxu0 %v503
        %814 = vmatpush.xpose.msra.mxu0 %v501
        %815 = vmatpush.xpose.msra.mxu0 %v499
        %816 = vmatpush.xpose.msra.mxu0 %v497
        %817 = vmatpush.xpose.msra.mxu0 %v495
        %818 = vmatpush.xpose.msra.mxu0 %v493
        %819 = vmatpush.xpose.msra.mxu0 %v491
        %820 = vmatpush.xpose.msra.mxu0 %v489
        %821 = vmatpush.xpose.msra.mxu0 %v487
        %822 = vmatpush.xpose.msra.mxu0 %v485
        %823 = vmatpush.xpose.msra.mxu0 %v483
        %824 = vmatpush.xpose.msra.mxu0 %v481
        %825 = vmatpush.xpose.msra.mxu0 %v479
        %826 = vmatpush.xpose.msra.mxu0 %v477
        %827 = vmatpush.xpose.msra.mxu0 %v475
        %828 = vmatpush.xpose.msra.mxu0 %v473
        %829 = vmatmul.f32.gmra.mxu0 %v510
        %v830 = vpop.f32.mrf.mxu0
        %v831 = vadd.f32 %v811, %v830
        %832 = vdwg.mxu0
        %vm833 = vcmask 1040384
        %v834 = vsel %vm833, %v551, -inf
        %835 = vmax.xlane.f32.xlu0 %v834
        %v836 = vpop.xlane.xlu0 %835
        %v837 = vsel %vm833, %v591, -inf
        %838 = vmax.xlane.f32.xlu0 %v837
        %v839 = vpop.xlane.xlu0 %838
        %v840 = vsel %vm833, %v631, -inf
        %841 = vmax.xlane.f32.xlu0 %v840
        %v842 = vpop.xlane.xlu0 %841
        %v843 = vsel %vm833, %v671, -inf
        %844 = vmax.xlane.f32.xlu0 %v843
        %v845 = vpop.xlane.xlu0 %844
        %v846 = vsel %vm833, %v711, -inf
        %847 = vmax.xlane.f32.xlu0 %v846
        %v848 = vpop.xlane.xlu0 %847
        %v849 = vsel %vm833, %v751, -inf
        %850 = vmax.xlane.f32.xlu0 %v849
        %v851 = vpop.xlane.xlu0 %850
        %v852 = vsel %vm833, %v791, -inf
        %853 = vmax.xlane.f32.xlu0 %v852
        %v854 = vpop.xlane.xlu0 %853
        %v855 = vsel %vm833, %v831, -inf
        %856 = vmax.xlane.f32.xlu0 %v855
        %v857 = vpop.xlane.xlu0 %856
        %v858 = vsub.f32 %v551, %v836
        %v859 = vsub.f32 %v591, %v839
        %v860 = vsub.f32 %v631, %v842
        %v861 = vsub.f32 %v671, %v845
        %v862 = vsub.f32 %v711, %v848
        %v863 = vsub.f32 %v751, %v851
        %v864 = vsub.f32 %v791, %v854
        %v865 = vsub.f32 %v831, %v857
        %v866 = vmul.f32 %v858, 1.442695
        %v867 = vpow.pop %v866
        %v868 = vmul.f32 %v859, 1.442695
        %v869 = vpow.pop %v868
        %v870 = vmul.f32 %v860, 1.442695
        %v871 = vpow.pop %v870
        %v872 = vmul.f32 %v861, 1.442695
        %v873 = vpow.pop %v872
        %v874 = vmul.f32 %v862, 1.442695
        %v875 = vpow.pop %v874
        %v876 = vmul.f32 %v863, 1.442695
        %v877 = vpow.pop %v876
        %v878 = vmul.f32 %v864, 1.442695
        %v879 = vpow.pop %v878
        %v880 = vmul.f32 %v865, 1.442695
        %v881 = vpow.pop %v880
        %v882 = vsel %vm833, %v867, 0.0
        %883 = vadd.xlane.f32.xlu0 %v882
        %v884 = vpop.xlane.xlu0 %883
        %v885 = vsel %vm833, %v869, 0.0
        %886 = vadd.xlane.f32.xlu0 %v885
        %v887 = vpop.xlane.xlu0 %886
        %v888 = vsel %vm833, %v871, 0.0
        %889 = vadd.xlane.f32.xlu0 %v888
        %v890 = vpop.xlane.xlu0 %889
        %v891 = vsel %vm833, %v873, 0.0
        %892 = vadd.xlane.f32.xlu0 %v891
        %v893 = vpop.xlane.xlu0 %892
        %v894 = vsel %vm833, %v875, 0.0
        %895 = vadd.xlane.f32.xlu0 %v894
        %v896 = vpop.xlane.xlu0 %895
        %v897 = vsel %vm833, %v877, 0.0
        %898 = vadd.xlane.f32.xlu0 %v897
        %v899 = vpop.xlane.xlu0 %898
        %v900 = vsel %vm833, %v879, 0.0
        %901 = vadd.xlane.f32.xlu0 %v900
        %v902 = vpop.xlane.xlu0 %901
        %v903 = vsel %vm833, %v881, 0.0
        %904 = vadd.xlane.f32.xlu0 %v903
        %v905 = vpop.xlane.xlu0 %904
        %v906 = vrcp.pop %v884
        %v907 = vmul.f32 %v884, %v906
        %v908 = vsub.f32 1.0, %v907
        %v909 = vmul.f32 %v906, %v908
        %v910 = vadd.f32 %v906, %v909
        %vm911 = vweird.f32 %v884
        %vm912 = vweird.f32 %v906
        %vm913 = vmor %vm911, %vm912
        %v914 = vsel %vm913, %v906, %v910
        %v915 = vand.u32 2147483647, %v884
        %vm916 = vcmp.eq.f32.partialorder %v915, 8.507059e+37
        %v917 = vand.u32 %v884, 2147483648
        %v918 = vor.u32 1.1754944e-38, %v917
        %v919 = vsel %vm916, %v918, %v914
        %v920 = vmul.f32 %v867, %v919
        %v921 = vrcp.pop %v887
        %v922 = vmul.f32 %v887, %v921
        %v923 = vsub.f32 1.0, %v922
        %v924 = vmul.f32 %v921, %v923
        %v925 = vadd.f32 %v921, %v924
        %vm926 = vweird.f32 %v887
        %vm927 = vweird.f32 %v921
        %vm928 = vmor %vm926, %vm927
        %v929 = vsel %vm928, %v921, %v925
        %v930 = vand.u32 2147483647, %v887
        %vm931 = vcmp.eq.f32.partialorder %v930, 8.507059e+37
        %v932 = vand.u32 %v887, 2147483648
        %v933 = vor.u32 1.1754944e-38, %v932
        %v934 = vsel %vm931, %v933, %v929
        %v935 = vmul.f32 %v869, %v934
        %v936 = vrcp.pop %v890
        %v937 = vmul.f32 %v890, %v936
        %v938 = vsub.f32 1.0, %v937
        %v939 = vmul.f32 %v936, %v938
        %v940 = vadd.f32 %v936, %v939
        %vm941 = vweird.f32 %v890
        %vm942 = vweird.f32 %v936
        %vm943 = vmor %vm941, %vm942
        %v944 = vsel %vm943, %v936, %v940
        %v945 = vand.u32 2147483647, %v890
        %vm946 = vcmp.eq.f32.partialorder %v945, 8.507059e+37
        %v947 = vand.u32 %v890, 2147483648
        %v948 = vor.u32 1.1754944e-38, %v947
        %v949 = vsel %vm946, %v948, %v944
        %v950 = vmul.f32 %v871, %v949
        %v951 = vrcp.pop %v893
        %v952 = vmul.f32 %v893, %v951
        %v953 = vsub.f32 1.0, %v952
        %v954 = vmul.f32 %v951, %v953
        %v955 = vadd.f32 %v951, %v954
        %vm956 = vweird.f32 %v893
        %vm957 = vweird.f32 %v951
        %vm958 = vmor %vm956, %vm957
        %v959 = vsel %vm958, %v951, %v955
        %v960 = vand.u32 2147483647, %v893
        %vm961 = vcmp.eq.f32.partialorder %v960, 8.507059e+37
        %v962 = vand.u32 %v893, 2147483648
        %v963 = vor.u32 1.1754944e-38, %v962
        %v964 = vsel %vm961, %v963, %v959
        %v965 = vmul.f32 %v873, %v964
        %v966 = vrcp.pop %v896
        %v967 = vmul.f32 %v896, %v966
        %v968 = vsub.f32 1.0, %v967
        %v969 = vmul.f32 %v966, %v968
        %v970 = vadd.f32 %v966, %v969
        %vm971 = vweird.f32 %v896
        %vm972 = vweird.f32 %v966
        %vm973 = vmor %vm971, %vm972
        %v974 = vsel %vm973, %v966, %v970
        %v975 = vand.u32 2147483647, %v896
        %vm976 = vcmp.eq.f32.partialorder %v975, 8.507059e+37
        %v977 = vand.u32 %v896, 2147483648
        %v978 = vor.u32 1.1754944e-38, %v977
        %v979 = vsel %vm976, %v978, %v974
        %v980 = vmul.f32 %v875, %v979
        %v981 = vrcp.pop %v899
        %v982 = vmul.f32 %v899, %v981
        %v983 = vsub.f32 1.0, %v982
        %v984 = vmul.f32 %v981, %v983
        %v985 = vadd.f32 %v981, %v984
        %vm986 = vweird.f32 %v899
        %vm987 = vweird.f32 %v981
        %vm988 = vmor %vm986, %vm987
        %v989 = vsel %vm988, %v981, %v985
        %v990 = vand.u32 2147483647, %v899
        %vm991 = vcmp.eq.f32.partialorder %v990, 8.507059e+37
        %v992 = vand.u32 %v899, 2147483648
        %v993 = vor.u32 1.1754944e-38, %v992
        %v994 = vsel %vm991, %v993, %v989
        %v995 = vmul.f32 %v877, %v994
        %v996 = vrcp.pop %v902
        %v997 = vmul.f32 %v902, %v996
        %v998 = vsub.f32 1.0, %v997
        %v999 = vmul.f32 %v996, %v998
        %v1000 = vadd.f32 %v996, %v999
        %vm1001 = vweird.f32 %v902
        %vm1002 = vweird.f32 %v996
        %vm1003 = vmor %vm1001, %vm1002
        %v1004 = vsel %vm1003, %v996, %v1000
        %v1005 = vand.u32 2147483647, %v902
        %vm1006 = vcmp.eq.f32.partialorder %v1005, 8.507059e+37
        %v1007 = vand.u32 %v902, 2147483648
        %v1008 = vor.u32 1.1754944e-38, %v1007
        %v1009 = vsel %vm1006, %v1008, %v1004
        %v1010 = vmul.f32 %v879, %v1009
        %v1011 = vrcp.pop %v905
        %v1012 = vmul.f32 %v905, %v1011
        %v1013 = vsub.f32 1.0, %v1012
        %v1014 = vmul.f32 %v1011, %v1013
        %v1015 = vadd.f32 %v1011, %v1014
        %vm1016 = vweird.f32 %v905
        %vm1017 = vweird.f32 %v1011
        %vm1018 = vmor %vm1016, %vm1017
        %v1019 = vsel %vm1018, %v1011, %v1015
        %v1020 = vand.u32 2147483647, %v905
        %vm1021 = vcmp.eq.f32.partialorder %v1020, 8.507059e+37
        %v1022 = vand.u32 %v905, 2147483648
        %v1023 = vor.u32 1.1754944e-38, %v1022
        %v1024 = vsel %vm1021, %v1023, %v1019
        %v1025 = vmul.f32 %v881, %v1024
        %1026 = vmatpush.msra.mxu0 %v278
        %1027 = vmatpush.msra.mxu0 %v276
        %1028 = vmatpush.msra.mxu0 %v274
        %1029 = vmatpush.msra.mxu0 %v272
        %1030 = vmatpush.msra.mxu0 %v270
        %1031 = vmatpush.msra.mxu0 %v268
        %1032 = vmatpush.msra.mxu0 %v266
        %1033 = vmatpush.msra.mxu0 %v264
        %1034 = vmatpush.msra.mxu0 %v262
        %1035 = vmatpush.msra.mxu0 %v260
        %1036 = vmatpush.msra.mxu0 %v258
        %1037 = vmatpush.msra.mxu0 %v256
        %1038 = vmatpush.msra.mxu0 %v254
        %1039 = vmatpush.msra.mxu0 %v252
        %1040 = vmatpush.msra.mxu0 %v250
        %1041 = vmatpush.msra.mxu0 %v248
        %1042 = vmatmul.f32.gmra.mxu0 %v920
        %v1043 = vpop.f32.mrf.mxu0
        %v1044 = vadd.f32 0.0, %v1043
        %1045 = vdwg.mxu0
        %1046 = vmatpush.msra.mxu0 %v279
        %1047 = vmatpush.msra.mxu0 %v277
        %1048 = vmatpush.msra.mxu0 %v275
        %1049 = vmatpush.msra.mxu0 %v273
        %1050 = vmatpush.msra.mxu0 %v271
        %1051 = vmatpush.msra.mxu0 %v269
        %1052 = vmatpush.msra.mxu0 %v267
        %1053 = vmatpush.msra.mxu0 %v265
        %1054 = vmatpush.msra.mxu0 %v263
        %1055 = vmatpush.msra.mxu0 %v261
        %1056 = vmatpush.msra.mxu0 %v259
        %1057 = vmatpush.msra.mxu0 %v257
        %1058 = vmatpush.msra.mxu0 %v255
        %1059 = vmatpush.msra.mxu0 %v253
        %1060 = vmatpush.msra.mxu0 %v251
        %1061 = vmatpush.msra.mxu0 %v249
        %1062 = vmatmul.f32.gmra.mxu0 %v920
        %v1063 = vpop.f32.mrf.mxu0
        %v1064 = vadd.f32 0.0, %v1063
        %1065 = vdwg.mxu0
        %1066 = vmatpush.msra.mxu0 %v310
        %1067 = vmatpush.msra.mxu0 %v308
        %1068 = vmatpush.msra.mxu0 %v306
        %1069 = vmatpush.msra.mxu0 %v304
        %1070 = vmatpush.msra.mxu0 %v302
        %1071 = vmatpush.msra.mxu0 %v300
        %1072 = vmatpush.msra.mxu0 %v298
        %1073 = vmatpush.msra.mxu0 %v296
        %1074 = vmatpush.msra.mxu0 %v294
        %1075 = vmatpush.msra.mxu0 %v292
        %1076 = vmatpush.msra.mxu0 %v290
        %1077 = vmatpush.msra.mxu0 %v288
        %1078 = vmatpush.msra.mxu0 %v286
        %1079 = vmatpush.msra.mxu0 %v284
        %1080 = vmatpush.msra.mxu0 %v282
        %1081 = vmatpush.msra.mxu0 %v280
        %1082 = vmatmul.f32.gmra.mxu0 %v935
        %v1083 = vpop.f32.mrf.mxu0
        %v1084 = vadd.f32 0.0, %v1083
        %1085 = vdwg.mxu0
        %1086 = vmatpush.msra.mxu0 %v311
        %1087 = vmatpush.msra.mxu0 %v309
        %1088 = vmatpush.msra.mxu0 %v307
        %1089 = vmatpush.msra.mxu0 %v305
        %1090 = vmatpush.msra.mxu0 %v303
        %1091 = vmatpush.msra.mxu0 %v301
        %1092 = vmatpush.msra.mxu0 %v299
        %1093 = vmatpush.msra.mxu0 %v297
        %1094 = vmatpush.msra.mxu0 %v295
        %1095 = vmatpush.msra.mxu0 %v293
        %1096 = vmatpush.msra.mxu0 %v291
        %1097 = vmatpush.msra.mxu0 %v289
        %1098 = vmatpush.msra.mxu0 %v287
        %1099 = vmatpush.msra.mxu0 %v285
        %1100 = vmatpush.msra.mxu0 %v283
        %1101 = vmatpush.msra.mxu0 %v281
        %1102 = vmatmul.f32.gmra.mxu0 %v935
        %v1103 = vpop.f32.mrf.mxu0
        %v1104 = vadd.f32 0.0, %v1103
        %1105 = vdwg.mxu0
        %1106 = vmatpush.msra.mxu0 %v342
        %1107 = vmatpush.msra.mxu0 %v340
        %1108 = vmatpush.msra.mxu0 %v338
        %1109 = vmatpush.msra.mxu0 %v336
        %1110 = vmatpush.msra.mxu0 %v334
        %1111 = vmatpush.msra.mxu0 %v332
        %1112 = vmatpush.msra.mxu0 %v330
        %1113 = vmatpush.msra.mxu0 %v328
        %1114 = vmatpush.msra.mxu0 %v326
        %1115 = vmatpush.msra.mxu0 %v324
        %1116 = vmatpush.msra.mxu0 %v322
        %1117 = vmatpush.msra.mxu0 %v320
        %1118 = vmatpush.msra.mxu0 %v318
        %1119 = vmatpush.msra.mxu0 %v316
        %1120 = vmatpush.msra.mxu0 %v314
        %1121 = vmatpush.msra.mxu0 %v312
        %1122 = vmatmul.f32.gmra.mxu0 %v950
        %v1123 = vpop.f32.mrf.mxu0
        %v1124 = vadd.f32 0.0, %v1123
        %1125 = vdwg.mxu0
        %1126 = vmatpush.msra.mxu0 %v343
        %1127 = vmatpush.msra.mxu0 %v341
        %1128 = vmatpush.msra.mxu0 %v339
        %1129 = vmatpush.msra.mxu0 %v337
        %1130 = vmatpush.msra.mxu0 %v335
        %1131 = vmatpush.msra.mxu0 %v333
        %1132 = vmatpush.msra.mxu0 %v331
        %1133 = vmatpush.msra.mxu0 %v329
        %1134 = vmatpush.msra.mxu0 %v327
        %1135 = vmatpush.msra.mxu0 %v325
        %1136 = vmatpush.msra.mxu0 %v323
        %1137 = vmatpush.msra.mxu0 %v321
        %1138 = vmatpush.msra.mxu0 %v319
        %1139 = vmatpush.msra.mxu0 %v317
        %1140 = vmatpush.msra.mxu0 %v315
        %1141 = vmatpush.msra.mxu0 %v313
        %1142 = vmatmul.f32.gmra.mxu0 %v950
        %v1143 = vpop.f32.mrf.mxu0
        %v1144 = vadd.f32 0.0, %v1143
        %1145 = vdwg.mxu0
        %1146 = vmatpush.msra.mxu0 %v374
        %1147 = vmatpush.msra.mxu0 %v372
        %1148 = vmatpush.msra.mxu0 %v370
        %1149 = vmatpush.msra.mxu0 %v368
        %1150 = vmatpush.msra.mxu0 %v366
        %1151 = vmatpush.msra.mxu0 %v364
        %1152 = vmatpush.msra.mxu0 %v362
        %1153 = vmatpush.msra.mxu0 %v360
        %1154 = vmatpush.msra.mxu0 %v358
        %1155 = vmatpush.msra.mxu0 %v356
        %1156 = vmatpush.msra.mxu0 %v354
        %1157 = vmatpush.msra.mxu0 %v352
        %1158 = vmatpush.msra.mxu0 %v350
        %1159 = vmatpush.msra.mxu0 %v348
        %1160 = vmatpush.msra.mxu0 %v346
        %1161 = vmatpush.msra.mxu0 %v344
        %1162 = vmatmul.f32.gmra.mxu0 %v965
        %v1163 = vpop.f32.mrf.mxu0
        %v1164 = vadd.f32 0.0, %v1163
        %1165 = vdwg.mxu0
        %1166 = vmatpush.msra.mxu0 %v375
        %1167 = vmatpush.msra.mxu0 %v373
        %1168 = vmatpush.msra.mxu0 %v371
        %1169 = vmatpush.msra.mxu0 %v369
        %1170 = vmatpush.msra.mxu0 %v367
        %1171 = vmatpush.msra.mxu0 %v365
        %1172 = vmatpush.msra.mxu0 %v363
        %1173 = vmatpush.msra.mxu0 %v361
        %1174 = vmatpush.msra.mxu0 %v359
        %1175 = vmatpush.msra.mxu0 %v357
        %1176 = vmatpush.msra.mxu0 %v355
        %1177 = vmatpush.msra.mxu0 %v353
        %1178 = vmatpush.msra.mxu0 %v351
        %1179 = vmatpush.msra.mxu0 %v349
        %1180 = vmatpush.msra.mxu0 %v347
        %1181 = vmatpush.msra.mxu0 %v345
        %1182 = vmatmul.f32.gmra.mxu0 %v965
        %v1183 = vpop.f32.mrf.mxu0
        %v1184 = vadd.f32 0.0, %v1183
        %1185 = vdwg.mxu0
        %1186 = vmatpush.msra.mxu0 %v406
        %1187 = vmatpush.msra.mxu0 %v404
        %1188 = vmatpush.msra.mxu0 %v402
        %1189 = vmatpush.msra.mxu0 %v400
        %1190 = vmatpush.msra.mxu0 %v398
        %1191 = vmatpush.msra.mxu0 %v396
        %1192 = vmatpush.msra.mxu0 %v394
        %1193 = vmatpush.msra.mxu0 %v392
        %1194 = vmatpush.msra.mxu0 %v390
        %1195 = vmatpush.msra.mxu0 %v388
        %1196 = vmatpush.msra.mxu0 %v386
        %1197 = vmatpush.msra.mxu0 %v384
        %1198 = vmatpush.msra.mxu0 %v382
        %1199 = vmatpush.msra.mxu0 %v380
        %1200 = vmatpush.msra.mxu0 %v378
        %1201 = vmatpush.msra.mxu0 %v376
        %1202 = vmatmul.f32.gmra.mxu0 %v980
        %v1203 = vpop.f32.mrf.mxu0
        %v1204 = vadd.f32 0.0, %v1203
        %1205 = vdwg.mxu0
        %1206 = vmatpush.msra.mxu0 %v407
        %1207 = vmatpush.msra.mxu0 %v405
        %1208 = vmatpush.msra.mxu0 %v403
        %1209 = vmatpush.msra.mxu0 %v401
        %1210 = vmatpush.msra.mxu0 %v399
        %1211 = vmatpush.msra.mxu0 %v397
        %1212 = vmatpush.msra.mxu0 %v395
        %1213 = vmatpush.msra.mxu0 %v393
        %1214 = vmatpush.msra.mxu0 %v391
        %1215 = vmatpush.msra.mxu0 %v389
        %1216 = vmatpush.msra.mxu0 %v387
        %1217 = vmatpush.msra.mxu0 %v385
        %1218 = vmatpush.msra.mxu0 %v383
        %1219 = vmatpush.msra.mxu0 %v381
        %1220 = vmatpush.msra.mxu0 %v379
        %1221 = vmatpush.msra.mxu0 %v377
        %1222 = vmatmul.f32.gmra.mxu0 %v980
        %v1223 = vpop.f32.mrf.mxu0
        %v1224 = vadd.f32 0.0, %v1223
        %1225 = vdwg.mxu0
        %1226 = vmatpush.msra.mxu0 %v438
        %1227 = vmatpush.msra.mxu0 %v436
        %1228 = vmatpush.msra.mxu0 %v434
        %1229 = vmatpush.msra.mxu0 %v432
        %1230 = vmatpush.msra.mxu0 %v430
        %1231 = vmatpush.msra.mxu0 %v428
        %1232 = vmatpush.msra.mxu0 %v426
        %1233 = vmatpush.msra.mxu0 %v424
        %1234 = vmatpush.msra.mxu0 %v422
        %1235 = vmatpush.msra.mxu0 %v420
        %1236 = vmatpush.msra.mxu0 %v418
        %1237 = vmatpush.msra.mxu0 %v416
        %1238 = vmatpush.msra.mxu0 %v414
        %1239 = vmatpush.msra.mxu0 %v412
        %1240 = vmatpush.msra.mxu0 %v410
        %1241 = vmatpush.msra.mxu0 %v408
        %1242 = vmatmul.f32.gmra.mxu0 %v995
        %v1243 = vpop.f32.mrf.mxu0
        %v1244 = vadd.f32 0.0, %v1243
        %1245 = vdwg.mxu0
        %1246 = vmatpush.msra.mxu0 %v439
        %1247 = vmatpush.msra.mxu0 %v437
        %1248 = vmatpush.msra.mxu0 %v435
        %1249 = vmatpush.msra.mxu0 %v433
        %1250 = vmatpush.msra.mxu0 %v431
        %1251 = vmatpush.msra.mxu0 %v429
        %1252 = vmatpush.msra.mxu0 %v427
        %1253 = vmatpush.msra.mxu0 %v425
        %1254 = vmatpush.msra.mxu0 %v423
        %1255 = vmatpush.msra.mxu0 %v421
        %1256 = vmatpush.msra.mxu0 %v419
        %1257 = vmatpush.msra.mxu0 %v417
        %1258 = vmatpush.msra.mxu0 %v415
        %1259 = vmatpush.msra.mxu0 %v413
        %1260 = vmatpush.msra.mxu0 %v411
        %1261 = vmatpush.msra.mxu0 %v409
        %1262 = vmatmul.f32.gmra.mxu0 %v995
        %v1263 = vpop.f32.mrf.mxu0
        %v1264 = vadd.f32 0.0, %v1263
        %1265 = vdwg.mxu0
        %1266 = vmatpush.msra.mxu0 %v470
        %1267 = vmatpush.msra.mxu0 %v468
        %1268 = vmatpush.msra.mxu0 %v466
        %1269 = vmatpush.msra.mxu0 %v464
        %1270 = vmatpush.msra.mxu0 %v462
        %1271 = vmatpush.msra.mxu0 %v460
        %1272 = vmatpush.msra.mxu0 %v458
        %1273 = vmatpush.msra.mxu0 %v456
        %1274 = vmatpush.msra.mxu0 %v454
        %1275 = vmatpush.msra.mxu0 %v452
        %1276 = vmatpush.msra.mxu0 %v450
        %1277 = vmatpush.msra.mxu0 %v448
        %1278 = vmatpush.msra.mxu0 %v446
        %1279 = vmatpush.msra.mxu0 %v444
        %1280 = vmatpush.msra.mxu0 %v442
        %1281 = vmatpush.msra.mxu0 %v440
        %1282 = vmatmul.f32.gmra.mxu0 %v1010
        %v1283 = vpop.f32.mrf.mxu0
        %v1284 = vadd.f32 0.0, %v1283
        %1285 = vdwg.mxu0
        %1286 = vmatpush.msra.mxu0 %v471
        %1287 = vmatpush.msra.mxu0 %v469
        %1288 = vmatpush.msra.mxu0 %v467
        %1289 = vmatpush.msra.mxu0 %v465
        %1290 = vmatpush.msra.mxu0 %v463
        %1291 = vmatpush.msra.mxu0 %v461
        %1292 = vmatpush.msra.mxu0 %v459
        %1293 = vmatpush.msra.mxu0 %v457
        %1294 = vmatpush.msra.mxu0 %v455
        %1295 = vmatpush.msra.mxu0 %v453
        %1296 = vmatpush.msra.mxu0 %v451
        %1297 = vmatpush.msra.mxu0 %v449
        %1298 = vmatpush.msra.mxu0 %v447
        %1299 = vmatpush.msra.mxu0 %v445
        %1300 = vmatpush.msra.mxu0 %v443
        %1301 = vmatpush.msra.mxu0 %v441
        %1302 = vmatmul.f32.gmra.mxu0 %v1010
        %v1303 = vpop.f32.mrf.mxu0
        %v1304 = vadd.f32 0.0, %v1303
        %1305 = vdwg.mxu0
        %1306 = vmatpush.msra.mxu0 %v502
        %1307 = vmatpush.msra.mxu0 %v500
        %1308 = vmatpush.msra.mxu0 %v498
        %1309 = vmatpush.msra.mxu0 %v496
        %1310 = vmatpush.msra.mxu0 %v494
        %1311 = vmatpush.msra.mxu0 %v492
        %1312 = vmatpush.msra.mxu0 %v490
        %1313 = vmatpush.msra.mxu0 %v488
        %1314 = vmatpush.msra.mxu0 %v486
        %1315 = vmatpush.msra.mxu0 %v484
        %1316 = vmatpush.msra.mxu0 %v482
        %1317 = vmatpush.msra.mxu0 %v480
        %1318 = vmatpush.msra.mxu0 %v478
        %1319 = vmatpush.msra.mxu0 %v476
        %1320 = vmatpush.msra.mxu0 %v474
        %1321 = vmatpush.msra.mxu0 %v472
        %1322 = vmatmul.f32.gmra.mxu0 %v1025
        %v1323 = vpop.f32.mrf.mxu0
        %v1324 = vadd.f32 0.0, %v1323
        %1325 = vdwg.mxu0
        %1326 = vmatpush.msra.mxu0 %v503
        %1327 = vmatpush.msra.mxu0 %v501
        %1328 = vmatpush.msra.mxu0 %v499
        %1329 = vmatpush.msra.mxu0 %v497
        %1330 = vmatpush.msra.mxu0 %v495
        %1331 = vmatpush.msra.mxu0 %v493
        %1332 = vmatpush.msra.mxu0 %v491
        %1333 = vmatpush.msra.mxu0 %v489
        %1334 = vmatpush.msra.mxu0 %v487
        %1335 = vmatpush.msra.mxu0 %v485
        %1336 = vmatpush.msra.mxu0 %v483
        %1337 = vmatpush.msra.mxu0 %v481
        %1338 = vmatpush.msra.mxu0 %v479
        %1339 = vmatpush.msra.mxu0 %v477
        %1340 = vmatpush.msra.mxu0 %v475
        %1341 = vmatpush.msra.mxu0 %v473
        %1342 = vmatmul.f32.gmra.mxu0 %v1025
        %v1343 = vpop.f32.mrf.mxu0
        %v1344 = vadd.f32 0.0, %v1343
        %1345 = vdwg.mxu0
        %v1362 = vrot.slane %v1084, 7
        %vm1363 = vcmask 1041409
        %v1364 = vsel %vm1363, %v1362, %v1044
        %v1365 = vrot.slane %v1124, 6
        %vm1366 = vcmask 1042434
        %v1367 = vsel %vm1366, %v1365, %v1364
        %v1368 = vrot.slane %v1164, 5
        %vm1369 = vcmask 1043459
        %v1370 = vsel %vm1369, %v1368, %v1367
        %v1371 = vrot.slane %v1204, 4
        %vm1372 = vcmask 1044484
        %v1373 = vsel %vm1372, %v1371, %v1370
        %v1374 = vrot.slane %v1244, 3
        %vm1375 = vcmask 1045509
        %v1376 = vsel %vm1375, %v1374, %v1373
        %v1377 = vrot.slane %v1284, 2
        %vm1378 = vcmask 1046534
        %v1379 = vsel %vm1378, %v1377, %v1376
        %v1380 = vrot.slane %v1324, 1
        %vm1381 = vcmask 1047559
        %v1382 = vsel %vm1381, %v1380, %v1379
        %v1383 = vrot.slane %v1104, 7
        %v1384 = vsel %vm1363, %v1383, %v1064
        %v1385 = vrot.slane %v1144, 6
        %v1386 = vsel %vm1366, %v1385, %v1384
        %v1387 = vrot.slane %v1184, 5
        %v1388 = vsel %vm1369, %v1387, %v1386
        %v1389 = vrot.slane %v1224, 4
        %v1390 = vsel %vm1372, %v1389, %v1388
        %v1391 = vrot.slane %v1264, 3
        %v1392 = vsel %vm1375, %v1391, %v1390
        %v1393 = vrot.slane %v1304, 2
        %v1394 = vsel %vm1378, %v1393, %v1392
        %v1395 = vrot.slane %v1344, 1
        %v1396 = vsel %vm1381, %v1395, %v1394
        %1399 = vst [vmem:[%s239] sm:$0xff] %v1382
        %1400 = vst [vmem:[%s239 + $0x8] sm:$0xff] %v1396
        %v1409 = vrot.slane %v935, 7
        %v1410 = vsel %vm1363, %v1409, %v920
        %v1411 = vrot.slane %v950, 6
        %v1412 = vsel %vm1366, %v1411, %v1410
        %v1413 = vrot.slane %v965, 5
        %v1414 = vsel %vm1369, %v1413, %v1412
        %v1415 = vrot.slane %v980, 4
        %v1416 = vsel %vm1372, %v1415, %v1414
        %v1417 = vrot.slane %v995, 3
        %v1418 = vsel %vm1375, %v1417, %v1416
        %v1419 = vrot.slane %v1010, 2
        %v1420 = vsel %vm1378, %v1419, %v1418
        %v1421 = vrot.slane %v1025, 1
        %v1422 = vsel %vm1381, %v1421, %v1420
        %1424 = vst [vmem:[%s246] sm:$0xff] %v1422
        %s1425 = sand.u32 %s104, 1
        %s1426 = scalar_lea.sflag [#allocation5], %s1425
        %s1427 = sand.u32 %s104, 1
        %s1428 = smul.addr %s1427, 16
        %s1429 = scalar_lea.vmem [#allocation8], %s1428
        %s1430 = sand.u32 %s130, 1
        %s1431 = scalar_lea.sflag [#allocation10], %s1430
        %s1432 = sand.u32 %s130, 1
        %s1433 = smul.addr %s1432, 8
        %s1434 = scalar_lea.vmem [#allocation9], %s1433
        // Predicated region
        $region41: #{sentiment_attention_forward.1} parent=31 // pred_check
          %p1435 = pneg %p114
        $region42: #{sentiment_attention_forward.1} parent=31 // pred_check_branch
          %1437 = sbr.rel (%p1435) target = $region44
        $region43: #{sentiment_attention_forward.1} parent=31 // pred_region
          %1439 = vsyncadd %s1426, 0
          %s1440 = smul.addr %s28, 2
          %s1441 = smul.addr %s1440, 8
          %s1442 = scalar_lea.hbm %s3, %s1441
          %s1444 = sshll.u32 %s1429, 4
          %s1445 = int_to_ptr.vmem [resolvable:$true] %s1444
          %s1446 = sshll.u32 %s1442, 4
          %s1447 = int_to_ptr.hbm [resolvable:$true] %s1446
          %1449 = dma.vmem_to_hbm [thread:$0]  %s1445, 256, %s1447, %s1426
        $region44: #{sentiment_attention_forward.1} parent=31 // pred_fallthru
          _
        // Predicated region
        $region45: #{sentiment_attention_forward.1} parent=31 // pred_check
          %p1450 = pneg %p140
        $region46: #{sentiment_attention_forward.1} parent=31 // pred_check_branch
          %1452 = sbr.rel (%p1450) target = $region48
        $region47: #{sentiment_attention_forward.1} parent=31 // pred_region
          %1454 = vsyncadd %s1431, 0
          %s1455 = smul.addr %s28, 8
          %s1456 = scalar_lea.hbm %s4, %s1455
          %s1458 = sshll.u32 %s1434, 4
          %s1459 = int_to_ptr.vmem [resolvable:$true] %s1458
          %s1460 = sshll.u32 %s1456, 4
          %s1461 = int_to_ptr.hbm [resolvable:$true] %s1460
          %1463 = dma.vmem_to_hbm [thread:$0]  %s1459, 128, %s1461, %s1431
        $region48: #{sentiment_attention_forward.1} parent=31 // pred_fallthru
          _
      $region32: #{sentiment_attention_forward.1} parent=5 // pred_fallthru
        _
      %p1464 = scmp.le.s32.totalorder 2, %s23
      // Predicated region
      $region49: #{sentiment_attention_forward.1} parent=5 // pred_check
        %p1465 = pneg %p1464
      $region50: #{sentiment_attention_forward.1} parent=5 // pred_check_branch
        %1467 = sbr.rel (%p1465) target = $region52
      $region51: #{sentiment_attention_forward.1} parent=5 // pred_region
        %s1468 = ssub.s32 %s23, 2
        // Predicated region
        $region53: #{sentiment_attention_forward.1} parent=51 // pred_check
          %p1469 = pneg %p120
        $region54: #{sentiment_attention_forward.1} parent=51 // pred_check_branch
          %1471 = sbr.rel (%p1469) target = $region56
        $region55: #{sentiment_attention_forward.1} parent=51 // pred_region
          %s1472 = sand.u32 %s105, 1
          %s1473 = scalar_lea.sflag [#allocation5], %s1472
          %s1474 = sand.u32 %s105, 1
          %s1475 = smul.addr %s1474, 16
          %s1476 = scalar_lea.vmem [#allocation8], %s1475
          %1478 = dma.done %s1473, 256
        $region56: #{sentiment_attention_forward.1} parent=51 // pred_fallthru
          _
        // Predicated region
        $region57: #{sentiment_attention_forward.1} parent=51 // pred_check
          %p1479 = pneg %p146
        $region58: #{sentiment_attention_forward.1} parent=51 // pred_check_branch
          %1481 = sbr.rel (%p1479) target = $region60
        $region59: #{sentiment_attention_forward.1} parent=51 // pred_region
          %s1482 = sand.u32 %s131, 1
          %s1483 = scalar_lea.sflag [#allocation10], %s1482
          %s1484 = sand.u32 %s131, 1
          %s1485 = smul.addr %s1484, 8
          %s1486 = scalar_lea.vmem [#allocation9], %s1485
          %1488 = dma.done %s1483, 128
        $region60: #{sentiment_attention_forward.1} parent=51 // pred_fallthru
          _
      $region52: #{sentiment_attention_forward.1} parent=5 // pred_fallthru
        _
    $region6: #{sentiment_attention_forward.1} parent=1 // loop_footer
      %s27 = sadd.s32 1, %s23
    $region7: #{sentiment_attention_forward.1} parent=1 // loop_footer_branch
      %22 = sbr.rel target = $region3
    $region8: #{sentiment_attention_forward.1} parent=1 // loop_exit
      _
    %1489 = vsyncpa [#allocation4], 1
    %s1490 = scalar_lea.sflag [#allocation4], 1
    %1491 = vsyncpa %s1490, 1
    %1492 = vsyncpa [#allocation7], 1
    %1493 = vsyncpa [#allocation5], 1
    %s1494 = scalar_lea.sflag [#allocation5], 1
    %1495 = vsyncpa %s1494, 1
    %1496 = vsyncpa [#allocation10], 1
    %s1497 = scalar_lea.sflag [#allocation10], 1
    %1498 = vsyncpa %s1497, 1

</llo_original>
